<compile_context>
chip_gen: v5e
topology: v5e:2x2
jax: 0.10.0
libtpu: 0.0.40
codegen_flags: <defaults>
</compile_context>

<pallas_src>
import jax
import jax.numpy as jnp
from jax.experimental import pallas as pl
from jax.experimental.pallas import tpu as pltpu


def mlp_kernel(x_ref,
               w1, b1, w2, b2, w3, b3, w4, b4, w5, b5, w6, b6,
               o_ref):
    """Fused 6-layer MLP: relu(x@W+b) x5, then final linear (no activation)."""
    h = x_ref[...].astype(jnp.bfloat16)

    def lin(h_bf16, w_ref, b_ref):
        # bf16 x bf16 on the MXU with f32 accumulation; bias add in f32.
        return jnp.dot(h_bf16, w_ref[...],
                       preferred_element_type=jnp.float32) + b_ref[...]

    def lin_relu(h_bf16, w_ref, b_ref):
        return jnp.maximum(lin(h_bf16, w_ref, b_ref), 0.0).astype(jnp.bfloat16)

    h = lin_relu(h, w1, b1)   # fc1 + relu   (gn1 identity in eval)
    h = lin_relu(h, w2, b2)   # fc2 + relu   (gn2 identity)
    h = lin_relu(h, w3, b3)   # fc3 + relu
    h = lin_relu(h, w4, b4)   # fc4 + relu
    h = lin_relu(h, w5, b5)   # fc5 + relu
    o_ref[...] = lin(h, w6, b6)   # out layer: no activation


def prepare_params(params):
    """One-time weight preparation: W -> bf16, b -> (1, out) f32. No padding."""
    prepared = []
    for (w, b) in params:
        prepared.append((jnp.asarray(w, jnp.bfloat16),
                         jnp.asarray(b, jnp.float32).reshape(1, -1)))
    return tuple(prepared)


@jax.jit
def model_nn_forward(x, prepared):
    """x: (B, input_shape) f32. prepared: output of prepare_params()."""
    B = x.shape[0]
    out_dim = prepared[-1][0].shape[1]
    flat = [a for wb in prepared for a in wb]

    vmem = pl.BlockSpec(memory_space=pltpu.MemorySpace.VMEM)

    flops = 2 * B * sum(int(w.shape[0]) * int(w.shape[1]) for (w, _) in prepared)
    bytes_accessed = (int(x.size) * x.dtype.itemsize
                      + sum(int(a.size) * a.dtype.itemsize for a in flat)
                      + B * out_dim * 4)

    return pl.pallas_call(
        mlp_kernel,
        out_shape=jax.ShapeDtypeStruct((B, out_dim), jnp.float32),
        in_specs=[vmem] * (1 + len(flat)),
        out_specs=vmem,
        cost_estimate=pl.CostEstimate(flops=flops,
                                      transcendentals=0,
                                      bytes_accessed=bytes_accessed),
    )(x, *flat)


def init_params(key, input_shape, output_shape):
    """Deterministic init mimicking nn.Linear (uniform +-1/sqrt(fan_in))."""
    sizes = [input_shape, 1000, 500, 250, 250, 250, output_shape]
    params = []
    for i in range(len(sizes) - 1):
        fan_in, fan_out = sizes[i], sizes[i + 1]
        key, kw, kb = jax.random.split(key, 3)
        bound = 1.0 / jnp.sqrt(fan_in)
        w = jax.random.uniform(kw, (fan_in, fan_out), jnp.float32, -bound, bound)
        b = jax.random.uniform(kb, (fan_out,), jnp.float32, -bound, bound)
        params.append((w, b))
    return params


def reference_forward_f32(x, params):
    h = x
    for (w, b) in params[:-1]:
        h = jnp.maximum(h @ w + b, 0.0)
    w, b = params[-1]
    return h @ w + b


def reference_forward_bf16(x, prepared):
    """Emulates the kernel's quantization points exactly (bf16 weights and
    bf16 activations feeding the matmul, f32 accumulation / bias / relu)."""
    h = x
    n = len(prepared)
    for i, (w, b) in enumerate(prepared):
        hq = h.astype(jnp.bfloat16).astype(jnp.float32)
        wf = w.astype(jnp.float32)
        y = hq @ wf + b
        h = jnp.maximum(y, 0.0) if i < n - 1 else y
    return h


if __name__ == "__main__":
    key = jax.random.PRNGKey(0)
    batch = 4
    input_shape = 32
    output_shape = 8

    kx, kp = jax.random.split(key)
    x = jax.random.normal(kx, (batch, input_shape), jnp.float32)
    params = init_params(kp, input_shape, output_shape)
    prepared = prepare_params(params)   # one-time bf16 conversion, no padding

    y = model_nn_forward(x, prepared)
    y = jax.block_until_ready(y)

    assert y.shape == (batch, output_shape), y.shape

    # Tight check against a reference with identical bf16 quantization points.
    y_ref_q = reference_forward_bf16(x, prepared)
    err_q = jnp.max(jnp.abs(y - y_ref_q))
    assert jnp.allclose(y, y_ref_q, atol=2e-3, rtol=2e-3), f"bf16-ref max err {err_q}"

    # Loose sanity check against the full-f32 reference (bf16 weights introduce
    # ~1% level differences by construction).
    y_ref = reference_forward_f32(x, params)
    err = jnp.max(jnp.abs(y - y_ref))
    assert jnp.allclose(y, y_ref, atol=5e-2, rtol=5e-2), f"f32-ref max err {err}"

    print("KERNEL_OK")
</pallas_src>

<mosaic_0001>
module attributes {stable_mosaic.version = 11 : i64} {
  func.func @mlp_kernel(%arg0: memref<4x32xf32, #tpu.memory_space<vmem>>, %arg1: memref<32x1000xbf16, #tpu.memory_space<vmem>>, %arg2: memref<1x1000xf32, #tpu.memory_space<vmem>>, %arg3: memref<1000x500xbf16, #tpu.memory_space<vmem>>, %arg4: memref<1x500xf32, #tpu.memory_space<vmem>>, %arg5: memref<500x250xbf16, #tpu.memory_space<vmem>>, %arg6: memref<1x250xf32, #tpu.memory_space<vmem>>, %arg7: memref<250x250xbf16, #tpu.memory_space<vmem>>, %arg8: memref<1x250xf32, #tpu.memory_space<vmem>>, %arg9: memref<250x250xbf16, #tpu.memory_space<vmem>>, %arg10: memref<1x250xf32, #tpu.memory_space<vmem>>, %arg11: memref<250x8xbf16, #tpu.memory_space<vmem>>, %arg12: memref<1x8xf32, #tpu.memory_space<vmem>>, %arg13: memref<4x8xf32, #tpu.memory_space<vmem>>) attributes {dimension_semantics = [], scalar_prefetch = 0 : i64, scratch_operands = 0 : i64, tpu.core_type = #tpu.core_type<tc>} {
    %c0 = arith.constant 0 : index
    %c0_0 = arith.constant 0 : index
    %0 = vector.load %arg0[%c0, %c0_0] : memref<4x32xf32, #tpu.memory_space<vmem>>, vector<4x32xf32>
    %1 = arith.truncf %0 : vector<4x32xf32> to vector<4x32xbf16>
    %c0_1 = arith.constant 0 : index
    %c0_2 = arith.constant 0 : index
    %2 = vector.load %arg1[%c0_1, %c0_2] : memref<32x1000xbf16, #tpu.memory_space<vmem>>, vector<32x1000xbf16>
    %cst = arith.constant dense<0.000000e+00> : vector<4x1000xf32>
    %3 = tpu.matmul %1, %2, %cst {dimension_numbers = #tpu.dot_dimension_numbers<[1], [0], [0], [1], [0, 0, 1, 1], [], []>} : vector<4x32xbf16>, vector<32x1000xbf16>, vector<4x1000xf32> -> vector<4x1000xf32>
    %c0_3 = arith.constant 0 : index
    %c0_4 = arith.constant 0 : index
    %4 = vector.load %arg2[%c0_3, %c0_4] : memref<1x1000xf32, #tpu.memory_space<vmem>>, vector<1x1000xf32>
    %5 = vector.broadcast %4 : vector<1x1000xf32> to vector<4x1000xf32>
    %6 = arith.addf %3, %5 : vector<4x1000xf32>
    %cst_5 = arith.constant 0.000000e+00 : f32
    %7 = vector.broadcast %cst_5 : f32 to vector<4x1000xf32>
    %8 = arith.maximumf %6, %7 : vector<4x1000xf32>
    %9 = arith.truncf %8 : vector<4x1000xf32> to vector<4x1000xbf16>
    %c0_6 = arith.constant 0 : index
    %c0_7 = arith.constant 0 : index
    %10 = vector.load %arg3[%c0_6, %c0_7] : memref<1000x500xbf16, #tpu.memory_space<vmem>>, vector<1000x500xbf16>
    %cst_8 = arith.constant dense<0.000000e+00> : vector<4x500xf32>
    %11 = tpu.matmul %9, %10, %cst_8 {dimension_numbers = #tpu.dot_dimension_numbers<[1], [0], [0], [1], [0, 0, 1, 1], [], []>} : vector<4x1000xbf16>, vector<1000x500xbf16>, vector<4x500xf32> -> vector<4x500xf32>
    %c0_9 = arith.constant 0 : index
    %c0_10 = arith.constant 0 : index
    %12 = vector.load %arg4[%c0_9, %c0_10] : memref<1x500xf32, #tpu.memory_space<vmem>>, vector<1x500xf32>
    %13 = vector.broadcast %12 : vector<1x500xf32> to vector<4x500xf32>
    %14 = arith.addf %11, %13 : vector<4x500xf32>
    %cst_11 = arith.constant 0.000000e+00 : f32
    %15 = vector.broadcast %cst_11 : f32 to vector<4x500xf32>
    %16 = arith.maximumf %14, %15 : vector<4x500xf32>
    %17 = arith.truncf %16 : vector<4x500xf32> to vector<4x500xbf16>
    %c0_12 = arith.constant 0 : index
    %c0_13 = arith.constant 0 : index
    %18 = vector.load %arg5[%c0_12, %c0_13] : memref<500x250xbf16, #tpu.memory_space<vmem>>, vector<500x250xbf16>
    %cst_14 = arith.constant dense<0.000000e+00> : vector<4x250xf32>
    %19 = tpu.matmul %17, %18, %cst_14 {dimension_numbers = #tpu.dot_dimension_numbers<[1], [0], [0], [1], [0, 0, 1, 1], [], []>} : vector<4x500xbf16>, vector<500x250xbf16>, vector<4x250xf32> -> vector<4x250xf32>
    %c0_15 = arith.constant 0 : index
    %c0_16 = arith.constant 0 : index
    %20 = vector.load %arg6[%c0_15, %c0_16] : memref<1x250xf32, #tpu.memory_space<vmem>>, vector<1x250xf32>
    %21 = vector.broadcast %20 : vector<1x250xf32> to vector<4x250xf32>
    %22 = arith.addf %19, %21 : vector<4x250xf32>
    %cst_17 = arith.constant 0.000000e+00 : f32
    %23 = vector.broadcast %cst_17 : f32 to vector<4x250xf32>
    %24 = arith.maximumf %22, %23 : vector<4x250xf32>
    %25 = arith.truncf %24 : vector<4x250xf32> to vector<4x250xbf16>
    %c0_18 = arith.constant 0 : index
    %c0_19 = arith.constant 0 : index
    %26 = vector.load %arg7[%c0_18, %c0_19] : memref<250x250xbf16, #tpu.memory_space<vmem>>, vector<250x250xbf16>
    %cst_20 = arith.constant dense<0.000000e+00> : vector<4x250xf32>
    %27 = tpu.matmul %25, %26, %cst_20 {dimension_numbers = #tpu.dot_dimension_numbers<[1], [0], [0], [1], [0, 0, 1, 1], [], []>} : vector<4x250xbf16>, vector<250x250xbf16>, vector<4x250xf32> -> vector<4x250xf32>
    %c0_21 = arith.constant 0 : index
    %c0_22 = arith.constant 0 : index
    %28 = vector.load %arg8[%c0_21, %c0_22] : memref<1x250xf32, #tpu.memory_space<vmem>>, vector<1x250xf32>
    %29 = vector.broadcast %28 : vector<1x250xf32> to vector<4x250xf32>
    %30 = arith.addf %27, %29 : vector<4x250xf32>
    %cst_23 = arith.constant 0.000000e+00 : f32
    %31 = vector.broadcast %cst_23 : f32 to vector<4x250xf32>
    %32 = arith.maximumf %30, %31 : vector<4x250xf32>
    %33 = arith.truncf %32 : vector<4x250xf32> to vector<4x250xbf16>
    %c0_24 = arith.constant 0 : index
    %c0_25 = arith.constant 0 : index
    %34 = vector.load %arg9[%c0_24, %c0_25] : memref<250x250xbf16, #tpu.memory_space<vmem>>, vector<250x250xbf16>
    %cst_26 = arith.constant dense<0.000000e+00> : vector<4x250xf32>
    %35 = tpu.matmul %33, %34, %cst_26 {dimension_numbers = #tpu.dot_dimension_numbers<[1], [0], [0], [1], [0, 0, 1, 1], [], []>} : vector<4x250xbf16>, vector<250x250xbf16>, vector<4x250xf32> -> vector<4x250xf32>
    %c0_27 = arith.constant 0 : index
    %c0_28 = arith.constant 0 : index
    %36 = vector.load %arg10[%c0_27, %c0_28] : memref<1x250xf32, #tpu.memory_space<vmem>>, vector<1x250xf32>
    %37 = vector.broadcast %36 : vector<1x250xf32> to vector<4x250xf32>
    %38 = arith.addf %35, %37 : vector<4x250xf32>
    %cst_29 = arith.constant 0.000000e+00 : f32
    %39 = vector.broadcast %cst_29 : f32 to vector<4x250xf32>
    %40 = arith.maximumf %38, %39 : vector<4x250xf32>
    %41 = arith.truncf %40 : vector<4x250xf32> to vector<4x250xbf16>
    %c0_30 = arith.constant 0 : index
    %c0_31 = arith.constant 0 : index
    %42 = vector.load %arg11[%c0_30, %c0_31] : memref<250x8xbf16, #tpu.memory_space<vmem>>, vector<250x8xbf16>
    %cst_32 = arith.constant dense<0.000000e+00> : vector<4x8xf32>
    %43 = tpu.matmul %41, %42, %cst_32 {dimension_numbers = #tpu.dot_dimension_numbers<[1], [0], [0], [1], [0, 0, 1, 1], [], []>} : vector<4x250xbf16>, vector<250x8xbf16>, vector<4x8xf32> -> vector<4x8xf32>
    %c0_33 = arith.constant 0 : index
    %c0_34 = arith.constant 0 : index
    %44 = vector.load %arg12[%c0_33, %c0_34] : memref<1x8xf32, #tpu.memory_space<vmem>>, vector<1x8xf32>
    %45 = vector.broadcast %44 : vector<1x8xf32> to vector<4x8xf32>
    %46 = arith.addf %43, %45 : vector<4x8xf32>
    %c0_35 = arith.constant 0 : index
    %c0_36 = arith.constant 0 : index
    %47 = vector.load %arg13[%c0_35, %c0_36] : memref<4x8xf32, #tpu.memory_space<vmem>>, vector<4x8xf32>
    tpu.vector_store %arg13[%c0_35, %c0_36], %46 {strides = array<i32>} : memref<4x8xf32, #tpu.memory_space<vmem>>, vector<4x8xf32>,
    return
  }
}

</mosaic_0001>

<llo_original>
// kernel: model_nn_forward.1
$region0: #{model_nn_forward.1}
  #allocation0 [shape = 'u32[]', space=smem, size = 0x4, offset = 0x4, fixed_abs, tag = 'smem constant byte address 0x4 - core index']
  #allocation1 [shape = 'u32[72,128]{1,0:T(1,128)}', space=vmem, size = 0x9000, scoped, tag = 'internal scratch']
  %s0 = inlined_call_operand.hbm [shape: f32[4,32], index: 0, kind: input, shape index: {}]
  %s1 = inlined_call_operand.vmem [shape: bf16[32,1000], index: 1, kind: input, shape index: {}]
  %s2 = inlined_call_operand.vmem [shape: f32[1,1000], index: 2, kind: input, shape index: {}]
  %s3 = inlined_call_operand.hbm [shape: bf16[1000,500], index: 3, kind: input, shape index: {}]
  %s4 = inlined_call_operand.hbm [shape: f32[1,500], index: 4, kind: input, shape index: {}]
  %s5 = inlined_call_operand.hbm [shape: bf16[500,250], index: 5, kind: input, shape index: {}]
  %s6 = inlined_call_operand.vmem [shape: f32[1,250], index: 6, kind: input, shape index: {}]
  %s7 = inlined_call_operand.hbm [shape: bf16[250,250], index: 7, kind: input, shape index: {}]
  %s8 = inlined_call_operand.hbm [shape: f32[1,250], index: 8, kind: input, shape index: {}]
  %s9 = inlined_call_operand.hbm [shape: bf16[250,250], index: 9, kind: input, shape index: {}]
  %s10 = inlined_call_operand.hbm [shape: f32[1,250], index: 10, kind: input, shape index: {}]
  %s11 = inlined_call_operand.vmem [shape: bf16[250,8], index: 11, kind: input, shape index: {}]
  %s12 = inlined_call_operand.vmem [shape: f32[1,8], index: 12, kind: input, shape index: {}]
  %s13 = inlined_call_operand.hbm [shape: f32[4,8], index: 13, kind: output, shape index: {}]
  %s14 = sld [smem:[#allocation0]]
  $region94: #{model_nn_forward.1} parent=0
    _
  %s16 = ssub.s32 1, %s14
  %s17 = scalar_select 0, %s16, %s14
  $region1: #{model_nn_forward.1} parent=0
    #allocation2 [shape = 'u8[2048]{0}', space=vmem, size = 0x800, scoped, tag = 'input window, operand 0, single buffered']
    #allocation3 [shape = 's32[1]{0}', space=sflag, size = 0x4, scoped, tag = 'scoped memory for model_nn_forward.1']
    #allocation4 [shape = 's32[1]{0}', space=sflag, size = 0x4, scoped, tag = 'scoped memory for model_nn_forward.1']
    #allocation5 [shape = 'u8[1024000]{0}', space=vmem, size = 0xfa000, scoped, tag = 'input window, operand 3, single buffered']
    #allocation6 [shape = 's32[1]{0}', space=sflag, size = 0x4, scoped, tag = 'scoped memory for model_nn_forward.1']
    #allocation7 [shape = 'u8[2048]{0}', space=vmem, size = 0x800, scoped, tag = 'input window, operand 4, single buffered']
    #allocation8 [shape = 'u8[258048]{0}', space=vmem, size = 0x3f000, scoped, tag = 'input window, operand 5, single buffered']
    #allocation9 [shape = 's32[1]{0}', space=sflag, size = 0x4, scoped, tag = 'scoped memory for model_nn_forward.1']
    #allocation10 [shape = 'u8[131072]{0}', space=vmem, size = 0x20000, scoped, tag = 'input window, operand 7, single buffered']
    #allocation11 [shape = 'u8[1024]{0}', space=vmem, size = 0x400, scoped, tag = 'input window, operand 8, single buffered']
    #allocation12 [shape = 's32[1]{0}', space=sflag, size = 0x4, scoped, tag = 'scoped memory for model_nn_forward.1']
    #allocation13 [shape = 'u8[131072]{0}', space=vmem, size = 0x20000, scoped, tag = 'input window, operand 9, single buffered']
    #allocation14 [shape = 'u8[1024]{0}', space=vmem, size = 0x400, scoped, tag = 'input window, operand 10, single buffered']
    #allocation15 [shape = 's32[1]{0}', space=sflag, size = 0x4, scoped, tag = 'scoped memory for model_nn_forward.1']
    #allocation16 [shape = 'u8[2048]{0}', space=vmem, size = 0x800, scoped, tag = 'output window, operand 0, single buffered']
    %18 = vsyncpa [#allocation3], 0
    %19 = vsyncpa [#allocation6], 0
    %20 = vsyncpa [#allocation9], 0
    %21 = vsyncpa [#allocation12], 0
    %22 = vsyncpa [#allocation15], 0
    %23 = vsyncpa [#allocation4], 0
    // Predicated region
    $region2: #{model_nn_forward.1} parent=1 // pred_check
      _
    $region3: #{model_nn_forward.1} parent=1 // pred_check_branch
      %25 = sbr.rel (0) target = $region5
    $region4: #{model_nn_forward.1} parent=1 // pred_region
      %27 = vsyncadd [#allocation3], 0
      %s29 = sshll.u32 %s0, 4
      %s30 = int_to_ptr.hbm [resolvable:$true] %s29
      %s31 = sshll.u32 [#allocation2], 4
      %s32 = int_to_ptr.vmem [resolvable:$true] %s31
      %34 = dma.hbm_to_vmem [thread:$0]  %s30, 64, %s32, [#allocation3]
    $region5: #{model_nn_forward.1} parent=1 // pred_fallthru
      _
    // Predicated region
    $region6: #{model_nn_forward.1} parent=1 // pred_check
      _
    $region7: #{model_nn_forward.1} parent=1 // pred_check_branch
      %36 = sbr.rel (0) target = $region9
    $region8: #{model_nn_forward.1} parent=1 // pred_region
      _
    $region9: #{model_nn_forward.1} parent=1 // pred_fallthru
      _
    // Predicated region
    $region10: #{model_nn_forward.1} parent=1 // pred_check
      _
    $region11: #{model_nn_forward.1} parent=1 // pred_check_branch
      %38 = sbr.rel (0) target = $region13
    $region12: #{model_nn_forward.1} parent=1 // pred_region
      _
    $region13: #{model_nn_forward.1} parent=1 // pred_fallthru
      _
    // Predicated region
    $region14: #{model_nn_forward.1} parent=1 // pred_check
      _
    $region15: #{model_nn_forward.1} parent=1 // pred_check_branch
      %40 = sbr.rel (0) target = $region17
    $region16: #{model_nn_forward.1} parent=1 // pred_region
      %42 = vsyncadd [#allocation6], 0
      %s43 = sshll.u32 %s3, 4
      %s44 = int_to_ptr.hbm [resolvable:$true] %s43
      %s45 = sshll.u32 [#allocation5], 4
      %s46 = int_to_ptr.vmem [resolvable:$true] %s45
      %51 = dma.hbm_to_vmem [thread:$0]  %s44, 32000, %s46, [#allocation6], 256, 256, 16
    $region17: #{model_nn_forward.1} parent=1 // pred_fallthru
      _
    // Predicated region
    $region18: #{model_nn_forward.1} parent=1 // pred_check
      _
    $region19: #{model_nn_forward.1} parent=1 // pred_check_branch
      %53 = sbr.rel (0) target = $region21
    $region20: #{model_nn_forward.1} parent=1 // pred_region
      %55 = vsyncadd [#allocation6], 0
      %s57 = sshll.u32 %s4, 4
      %s58 = int_to_ptr.hbm [resolvable:$true] %s57
      %s59 = sshll.u32 [#allocation7], 4
      %s60 = int_to_ptr.vmem [resolvable:$true] %s59
      %62 = dma.hbm_to_vmem [thread:$0]  %s58, 64, %s60, [#allocation6]
    $region21: #{model_nn_forward.1} parent=1 // pred_fallthru
      _
    // Predicated region
    $region22: #{model_nn_forward.1} parent=1 // pred_check
      _
    $region23: #{model_nn_forward.1} parent=1 // pred_check_branch
      %64 = sbr.rel (0) target = $region25
    $region24: #{model_nn_forward.1} parent=1 // pred_region
      %66 = vsyncadd [#allocation9], 0
      %s67 = sshll.u32 %s5, 4
      %s68 = int_to_ptr.hbm [resolvable:$true] %s67
      %s69 = sshll.u32 [#allocation8], 4
      %s70 = int_to_ptr.vmem [resolvable:$true] %s69
      %75 = dma.hbm_to_vmem [thread:$0]  %s68, 8064, %s70, [#allocation9], 128, 128, 8
    $region25: #{model_nn_forward.1} parent=1 // pred_fallthru
      _
    // Predicated region
    $region26: #{model_nn_forward.1} parent=1 // pred_check
      _
    $region27: #{model_nn_forward.1} parent=1 // pred_check_branch
      %77 = sbr.rel (0) target = $region29
    $region28: #{model_nn_forward.1} parent=1 // pred_region
      _
    $region29: #{model_nn_forward.1} parent=1 // pred_fallthru
      _
    // Predicated region
    $region30: #{model_nn_forward.1} parent=1 // pred_check
      _
    $region31: #{model_nn_forward.1} parent=1 // pred_check_branch
      %79 = sbr.rel (0) target = $region33
    $region32: #{model_nn_forward.1} parent=1 // pred_region
      %81 = vsyncadd [#allocation9], 0
      %s82 = sshll.u32 %s7, 4
      %s83 = int_to_ptr.hbm [resolvable:$true] %s82
      %s84 = sshll.u32 [#allocation10], 4
      %s85 = int_to_ptr.vmem [resolvable:$true] %s84
      %90 = dma.hbm_to_vmem [thread:$0]  %s83, 4096, %s85, [#allocation9], 128, 128, 8
    $region33: #{model_nn_forward.1} parent=1 // pred_fallthru
      _
    // Predicated region
    $region34: #{model_nn_forward.1} parent=1 // pred_check
      _
    $region35: #{model_nn_forward.1} parent=1 // pred_check_branch
      %92 = sbr.rel (0) target = $region37
    $region36: #{model_nn_forward.1} parent=1 // pred_region
      %94 = vsyncadd [#allocation12], 0
      %s96 = sshll.u32 %s8, 4
      %s97 = int_to_ptr.hbm [resolvable:$true] %s96
      %s98 = sshll.u32 [#allocation11], 4
      %s99 = int_to_ptr.vmem [resolvable:$true] %s98
      %101 = dma.hbm_to_vmem [thread:$0]  %s97, 32, %s99, [#allocation12]
    $region37: #{model_nn_forward.1} parent=1 // pred_fallthru
      _
    // Predicated region
    $region38: #{model_nn_forward.1} parent=1 // pred_check
      _
    $region39: #{model_nn_forward.1} parent=1 // pred_check_branch
      %103 = sbr.rel (0) target = $region41
    $region40: #{model_nn_forward.1} parent=1 // pred_region
      %105 = vsyncadd [#allocation12], 0
      %s106 = sshll.u32 %s9, 4
      %s107 = int_to_ptr.hbm [resolvable:$true] %s106
      %s108 = sshll.u32 [#allocation13], 4
      %s109 = int_to_ptr.vmem [resolvable:$true] %s108
      %114 = dma.hbm_to_vmem [thread:$0]  %s107, 4096, %s109, [#allocation12], 128, 128, 8
    $region41: #{model_nn_forward.1} parent=1 // pred_fallthru
      _
    // Predicated region
    $region42: #{model_nn_forward.1} parent=1 // pred_check
      _
    $region43: #{model_nn_forward.1} parent=1 // pred_check_branch
      %116 = sbr.rel (0) target = $region45
    $region44: #{model_nn_forward.1} parent=1 // pred_region
      %118 = vsyncadd [#allocation15], 0
      %s120 = sshll.u32 %s10, 4
      %s121 = int_to_ptr.hbm [resolvable:$true] %s120
      %s122 = sshll.u32 [#allocation14], 4
      %s123 = int_to_ptr.vmem [resolvable:$true] %s122
      %125 = dma.hbm_to_vmem [thread:$0]  %s121, 32, %s123, [#allocation15]
    $region45: #{model_nn_forward.1} parent=1 // pred_fallthru
      _
    // Predicated region
    $region46: #{model_nn_forward.1} parent=1 // pred_check
      _
    $region47: #{model_nn_forward.1} parent=1 // pred_check_branch
      %127 = sbr.rel (0) target = $region49
    $region48: #{model_nn_forward.1} parent=1 // pred_region
      _
    $region49: #{model_nn_forward.1} parent=1 // pred_fallthru
      _
    // Predicated region
    $region50: #{model_nn_forward.1} parent=1 // pred_check
      _
    $region51: #{model_nn_forward.1} parent=1 // pred_check_branch
      %129 = sbr.rel (0) target = $region53
    $region52: #{model_nn_forward.1} parent=1 // pred_region
      _
    $region53: #{model_nn_forward.1} parent=1 // pred_fallthru
      _
    // Predicated region
    $region54: #{model_nn_forward.1} parent=1 // pred_check
      _
    $region55: #{model_nn_forward.1} parent=1 // pred_check_branch
      %131 = sbr.rel (0) target = $region57
    $region56: #{model_nn_forward.1} parent=1 // pred_region
      %133 = dma.done [#allocation3], 64
    $region57: #{model_nn_forward.1} parent=1 // pred_fallthru
      _
    // Predicated region
    $region58: #{model_nn_forward.1} parent=1 // pred_check
      _
    $region59: #{model_nn_forward.1} parent=1 // pred_check_branch
      %135 = sbr.rel (0) target = $region61
    $region60: #{model_nn_forward.1} parent=1 // pred_region
      %137 = dma.done [#allocation6], 32000
    $region61: #{model_nn_forward.1} parent=1 // pred_fallthru
      _
    // Predicated region
    $region62: #{model_nn_forward.1} parent=1 // pred_check
      _
    $region63: #{model_nn_forward.1} parent=1 // pred_check_branch
      %139 = sbr.rel (0) target = $region65
    $region64: #{model_nn_forward.1} parent=1 // pred_region
      %141 = dma.done [#allocation6], 64
    $region65: #{model_nn_forward.1} parent=1 // pred_fallthru
      _
    // Predicated region
    $region66: #{model_nn_forward.1} parent=1 // pred_check
      _
    $region67: #{model_nn_forward.1} parent=1 // pred_check_branch
      %143 = sbr.rel (0) target = $region69
    $region68: #{model_nn_forward.1} parent=1 // pred_region
      %145 = dma.done [#allocation9], 8064
    $region69: #{model_nn_forward.1} parent=1 // pred_fallthru
      _
    // Predicated region
    $region70: #{model_nn_forward.1} parent=1 // pred_check
      _
    $region71: #{model_nn_forward.1} parent=1 // pred_check_branch
      %147 = sbr.rel (0) target = $region73
    $region72: #{model_nn_forward.1} parent=1 // pred_region
      %149 = dma.done [#allocation9], 4096
    $region73: #{model_nn_forward.1} parent=1 // pred_fallthru
      _
    // Predicated region
    $region74: #{model_nn_forward.1} parent=1 // pred_check
      _
    $region75: #{model_nn_forward.1} parent=1 // pred_check_branch
      %151 = sbr.rel (0) target = $region77
    $region76: #{model_nn_forward.1} parent=1 // pred_region
      %153 = dma.done [#allocation12], 32
    $region77: #{model_nn_forward.1} parent=1 // pred_fallthru
      _
    // Predicated region
    $region78: #{model_nn_forward.1} parent=1 // pred_check
      _
    $region79: #{model_nn_forward.1} parent=1 // pred_check_branch
      %155 = sbr.rel (0) target = $region81
    $region80: #{model_nn_forward.1} parent=1 // pred_region
      %157 = dma.done [#allocation12], 4096
    $region81: #{model_nn_forward.1} parent=1 // pred_fallthru
      _
    // Predicated region
    $region82: #{model_nn_forward.1} parent=1 // pred_check
      _
    $region83: #{model_nn_forward.1} parent=1 // pred_check_branch
      %159 = sbr.rel (0) target = $region85
    $region84: #{model_nn_forward.1} parent=1 // pred_region
      %161 = dma.done [#allocation15], 32
    $region85: #{model_nn_forward.1} parent=1 // pred_fallthru
      _
    %v163 = vld [vmem:[#allocation2] sm:$0xf]
    %v164 = vpack.c.bf16 %v163, %v163
    %v165 = vld [vmem:[%s1] sm:$0xff]
    %v166 = vld [vmem:[%s1 + $0x8] sm:$0xff]
    %v167 = vld [vmem:[%s1 + $0x10] sm:$0xff]
    %v168 = vld [vmem:[%s1 + $0x18] sm:$0xff]
    %v169 = vld [vmem:[%s1 + $0x20] sm:$0xff]
    %v170 = vld [vmem:[%s1 + $0x28] sm:$0xff]
    %v171 = vld [vmem:[%s1 + $0x30] sm:$0xff]
    %v172 = vld [vmem:[%s1 + $0x38] sm:$0xff]
    %v173 = vld [vmem:[%s1 + $0x40] sm:$0xff]
    %v174 = vld [vmem:[%s1 + $0x48] sm:$0xff]
    %v175 = vld [vmem:[%s1 + $0x50] sm:$0xff]
    %v176 = vld [vmem:[%s1 + $0x58] sm:$0xff]
    %v177 = vld [vmem:[%s1 + $0x60] sm:$0xff]
    %v178 = vld [vmem:[%s1 + $0x68] sm:$0xff]
    %v179 = vld [vmem:[%s1 + $0x70] sm:$0xff]
    %v180 = vld [vmem:[%s1 + $0x78] sm:$0xff]
    %v181 = vld [vmem:[%s2] sm:$0xff]
    %v183 = vperm.slane %v181, 0
    %v184 = vperm.slane %v181, 1
    %v185 = vperm.slane %v181, 2
    %v186 = vperm.slane %v181, 3
    %v187 = vperm.slane %v181, 4
    %v188 = vperm.slane %v181, 5
    %v189 = vperm.slane %v181, 6
    %v190 = vperm.slane %v181, 7
    %v215 = vunpack.c.l.b16 %v165
    %v216 = vunpack.c.h.b16 %v165
    %v217 = vunpack.c.l.b16 %v166
    %v218 = vunpack.c.h.b16 %v166
    %v219 = vunpack.c.l.b16 %v167
    %v220 = vunpack.c.h.b16 %v167
    %v221 = vunpack.c.l.b16 %v168
    %v222 = vunpack.c.h.b16 %v168
    %v223 = vunpack.c.l.b16 %v169
    %v224 = vunpack.c.h.b16 %v169
    %v225 = vunpack.c.l.b16 %v170
    %v226 = vunpack.c.h.b16 %v170
    %v227 = vunpack.c.l.b16 %v171
    %v228 = vunpack.c.h.b16 %v171
    %v229 = vunpack.c.l.b16 %v172
    %v230 = vunpack.c.h.b16 %v172
    %v231 = vunpack.c.l.b16 %v173
    %v232 = vunpack.c.h.b16 %v173
    %v233 = vunpack.c.l.b16 %v174
    %v234 = vunpack.c.h.b16 %v174
    %v235 = vunpack.c.l.b16 %v175
    %v236 = vunpack.c.h.b16 %v175
    %v237 = vunpack.c.l.b16 %v176
    %v238 = vunpack.c.h.b16 %v176
    %v239 = vunpack.c.l.b16 %v177
    %v240 = vunpack.c.h.b16 %v177
    %v241 = vunpack.c.l.b16 %v178
    %v242 = vunpack.c.h.b16 %v178
    %v243 = vunpack.c.l.b16 %v179
    %v244 = vunpack.c.h.b16 %v179
    %v245 = vunpack.c.l.b16 %v180
    %v246 = vunpack.c.h.b16 %v180
    %v247 = vpack.c.b16 %v223, %v215
    %v248 = vpack.c.b16 %v224, %v216
    %v249 = vpack.c.b16 %v225, %v217
    %v250 = vpack.c.b16 %v226, %v218
    %v251 = vpack.c.b16 %v227, %v219
    %v252 = vpack.c.b16 %v228, %v220
    %v253 = vpack.c.b16 %v229, %v221
    %v254 = vpack.c.b16 %v230, %v222
    %v255 = vpack.c.b16 %v239, %v231
    %v256 = vpack.c.b16 %v240, %v232
    %v257 = vpack.c.b16 %v241, %v233
    %v258 = vpack.c.b16 %v242, %v234
    %v259 = vpack.c.b16 %v243, %v235
    %v260 = vpack.c.b16 %v244, %v236
    %v261 = vpack.c.b16 %v245, %v237
    %v262 = vpack.c.b16 %v246, %v238
    %vm279 = vcmask 261120
    %v281 = vsel %vm279, %v164, 0
    %283 = vmatpush.bf16.msra.mxu0 0
    %284 = vmatpush.bf16.msra.mxu0 0
    %285 = vmatpush.bf16.msra.mxu0 0
    %286 = vmatpush.bf16.msra.mxu0 0
    %287 = vmatpush.bf16.msra.mxu0 0
    %288 = vmatpush.bf16.msra.mxu0 0
    %289 = vmatpush.bf16.msra.mxu0 %v255
    %290 = vmatpush.bf16.msra.mxu0 %v247
    %291 = vmatmul.bf16.gmra.mxu0 %v281
    %v292 = vpop.f32.mrf.mxu0
    %v293 = vadd.f32 %v183, %v292
    %v294 = vpop.f32.mrf.mxu0
    %295 = vdwg.mxu0
    %296 = vmatpush.bf16.msra.mxu0 0
    %297 = vmatpush.bf16.msra.mxu0 0
    %298 = vmatpush.bf16.msra.mxu0 0
    %299 = vmatpush.bf16.msra.mxu0 0
    %300 = vmatpush.bf16.msra.mxu0 0
    %301 = vmatpush.bf16.msra.mxu0 0
    %302 = vmatpush.bf16.msra.mxu0 %v256
    %303 = vmatpush.bf16.msra.mxu0 %v248
    %304 = vmatmul.bf16.gmra.mxu0 %v281
    %v305 = vpop.f32.mrf.mxu0
    %v306 = vadd.f32 %v184, %v305
    %v307 = vpop.f32.mrf.mxu0
    %308 = vdwg.mxu0
    %309 = vmatpush.bf16.msra.mxu0 0
    %310 = vmatpush.bf16.msra.mxu0 0
    %311 = vmatpush.bf16.msra.mxu0 0
    %312 = vmatpush.bf16.msra.mxu0 0
    %313 = vmatpush.bf16.msra.mxu0 0
    %314 = vmatpush.bf16.msra.mxu0 0
    %315 = vmatpush.bf16.msra.mxu0 %v257
    %316 = vmatpush.bf16.msra.mxu0 %v249
    %317 = vmatmul.bf16.gmra.mxu0 %v281
    %v318 = vpop.f32.mrf.mxu0
    %v319 = vadd.f32 %v185, %v318
    %v320 = vpop.f32.mrf.mxu0
    %321 = vdwg.mxu0
    %322 = vmatpush.bf16.msra.mxu0 0
    %323 = vmatpush.bf16.msra.mxu0 0
    %324 = vmatpush.bf16.msra.mxu0 0
    %325 = vmatpush.bf16.msra.mxu0 0
    %326 = vmatpush.bf16.msra.mxu0 0
    %327 = vmatpush.bf16.msra.mxu0 0
    %328 = vmatpush.bf16.msra.mxu0 %v258
    %329 = vmatpush.bf16.msra.mxu0 %v250
    %330 = vmatmul.bf16.gmra.mxu0 %v281
    %v331 = vpop.f32.mrf.mxu0
    %v332 = vadd.f32 %v186, %v331
    %v333 = vpop.f32.mrf.mxu0
    %334 = vdwg.mxu0
    %335 = vmatpush.bf16.msra.mxu0 0
    %336 = vmatpush.bf16.msra.mxu0 0
    %337 = vmatpush.bf16.msra.mxu0 0
    %338 = vmatpush.bf16.msra.mxu0 0
    %339 = vmatpush.bf16.msra.mxu0 0
    %340 = vmatpush.bf16.msra.mxu0 0
    %341 = vmatpush.bf16.msra.mxu0 %v259
    %342 = vmatpush.bf16.msra.mxu0 %v251
    %343 = vmatmul.bf16.gmra.mxu0 %v281
    %v344 = vpop.f32.mrf.mxu0
    %v345 = vadd.f32 %v187, %v344
    %v346 = vpop.f32.mrf.mxu0
    %347 = vdwg.mxu0
    %348 = vmatpush.bf16.msra.mxu0 0
    %349 = vmatpush.bf16.msra.mxu0 0
    %350 = vmatpush.bf16.msra.mxu0 0
    %351 = vmatpush.bf16.msra.mxu0 0
    %352 = vmatpush.bf16.msra.mxu0 0
    %353 = vmatpush.bf16.msra.mxu0 0
    %354 = vmatpush.bf16.msra.mxu0 %v260
    %355 = vmatpush.bf16.msra.mxu0 %v252
    %356 = vmatmul.bf16.gmra.mxu0 %v281
    %v357 = vpop.f32.mrf.mxu0
    %v358 = vadd.f32 %v188, %v357
    %v359 = vpop.f32.mrf.mxu0
    %360 = vdwg.mxu0
    %361 = vmatpush.bf16.msra.mxu0 0
    %362 = vmatpush.bf16.msra.mxu0 0
    %363 = vmatpush.bf16.msra.mxu0 0
    %364 = vmatpush.bf16.msra.mxu0 0
    %365 = vmatpush.bf16.msra.mxu0 0
    %366 = vmatpush.bf16.msra.mxu0 0
    %367 = vmatpush.bf16.msra.mxu0 %v261
    %368 = vmatpush.bf16.msra.mxu0 %v253
    %369 = vmatmul.bf16.gmra.mxu0 %v281
    %v370 = vpop.f32.mrf.mxu0
    %v371 = vadd.f32 %v189, %v370
    %v372 = vpop.f32.mrf.mxu0
    %373 = vdwg.mxu0
    %374 = vmatpush.bf16.msra.mxu0 0
    %375 = vmatpush.bf16.msra.mxu0 0
    %376 = vmatpush.bf16.msra.mxu0 0
    %377 = vmatpush.bf16.msra.mxu0 0
    %378 = vmatpush.bf16.msra.mxu0 0
    %379 = vmatpush.bf16.msra.mxu0 0
    %380 = vmatpush.bf16.msra.mxu0 %v262
    %381 = vmatpush.bf16.msra.mxu0 %v254
    %382 = vmatmul.bf16.gmra.mxu0 %v281
    %v383 = vpop.f32.mrf.mxu0
    %v384 = vadd.f32 %v190, %v383
    %v385 = vpop.f32.mrf.mxu0
    %386 = vdwg.mxu0
    %v387 = vmax.f32 %v293, 0.0
    %v388 = vmax.f32 %v306, 0.0
    %v389 = vmax.f32 %v319, 0.0
    %v390 = vmax.f32 %v332, 0.0
    %v391 = vmax.f32 %v345, 0.0
    %v392 = vmax.f32 %v358, 0.0
    %v393 = vmax.f32 %v371, 0.0
    %v394 = vmax.f32 %v384, 0.0
    %v395 = vpack.c.bf16 %v387, %v387
    %v396 = vpack.c.bf16 %v388, %v388
    %v397 = vpack.c.bf16 %v389, %v389
    %v398 = vpack.c.bf16 %v390, %v390
    %v399 = vpack.c.bf16 %v391, %v391
    %v400 = vpack.c.bf16 %v392, %v392
    %v401 = vpack.c.bf16 %v393, %v393
    %v402 = vpack.c.bf16 %v394, %v394
    %v403 = vld [vmem:[#allocation5] sm:$0xff]
    %v404 = vld [vmem:[#allocation5 + $0x8] sm:$0xff]
    %v405 = vld [vmem:[#allocation5 + $0x10] sm:$0xff]
    %v406 = vld [vmem:[#allocation5 + $0x18] sm:$0xff]
    %v407 = vld [vmem:[#allocation5 + $0x20] sm:$0xff]
    %v408 = vld [vmem:[#allocation5 + $0x28] sm:$0xff]
    %v409 = vld [vmem:[#allocation5 + $0x30] sm:$0xff]
    %v410 = vld [vmem:[#allocation5 + $0x38] sm:$0xff]
    %v411 = vld [vmem:[#allocation5 + $0x40] sm:$0xff]
    %v412 = vld [vmem:[#allocation5 + $0x48] sm:$0xff]
    %v413 = vld [vmem:[#allocation5 + $0x50] sm:$0xff]
    %v414 = vld [vmem:[#allocation5 + $0x58] sm:$0xff]
    %v415 = vld [vmem:[#allocation5 + $0x60] sm:$0xff]
    %v416 = vld [vmem:[#allocation5 + $0x68] sm:$0xff]
    %v417 = vld [vmem:[#allocation5 + $0x70] sm:$0xff]
    %v418 = vld [vmem:[#allocation5 + $0x78] sm:$0xff]
    %v419 = vld [vmem:[#allocation5 + $0x80] sm:$0xff]
    %v420 = vld [vmem:[#allocation5 + $0x88] sm:$0xff]
    %v421 = vld [vmem:[#allocation5 + $0x90] sm:$0xff]
    %v422 = vld [vmem:[#allocation5 + $0x98] sm:$0xff]
    %v423 = vld [vmem:[#allocation5 + $0xa0] sm:$0xff]
    %v424 = vld [vmem:[#allocation5 + $0xa8] sm:$0xff]
    %v425 = vld [vmem:[#allocation5 + $0xb0] sm:$0xff]
    %v426 = vld [vmem:[#allocation5 + $0xb8] sm:$0xff]
    %v427 = vld [vmem:[#allocation5 + $0xc0] sm:$0xff]
    %v428 = vld [vmem:[#allocation5 + $0xc8] sm:$0xff]
    %v429 = vld [vmem:[#allocation5 + $0xd0] sm:$0xff]
    %v430 = vld [vmem:[#allocation5 + $0xd8] sm:$0xff]
    %v431 = vld [vmem:[#allocation5 + $0xe0] sm:$0xff]
    %v432 = vld [vmem:[#allocation5 + $0xe8] sm:$0xff]
    %v433 = vld [vmem:[#allocation5 + $0xf0] sm:$0xff]
    %v434 = vld [vmem:[#allocation5 + $0xf8] sm:$0xff]
    %v435 = vld [vmem:[#allocation5 + $0x100] sm:$0xff]
    %v436 = vld [vmem:[#allocation5 + $0x108] sm:$0xff]
    %v437 = vld [vmem:[#allocation5 + $0x110] sm:$0xff]
    %v438 = vld [vmem:[#allocation5 + $0x118] sm:$0xff]
    %v439 = vld [vmem:[#allocation5 + $0x120] sm:$0xff]
    %v440 = vld [vmem:[#allocation5 + $0x128] sm:$0xff]
    %v441 = vld [vmem:[#allocation5 + $0x130] sm:$0xff]
    %v442 = vld [vmem:[#allocation5 + $0x138] sm:$0xff]
    %v443 = vld [vmem:[#allocation5 + $0x140] sm:$0xff]
    %v444 = vld [vmem:[#allocation5 + $0x148] sm:$0xff]
    %v445 = vld [vmem:[#allocation5 + $0x150] sm:$0xff]
    %v446 = vld [vmem:[#allocation5 + $0x158] sm:$0xff]
    %v447 = vld [vmem:[#allocation5 + $0x160] sm:$0xff]
    %v448 = vld [vmem:[#allocation5 + $0x168] sm:$0xff]
    %v449 = vld [vmem:[#allocation5 + $0x170] sm:$0xff]
    %v450 = vld [vmem:[#allocation5 + $0x178] sm:$0xff]
    %v451 = vld [vmem:[#allocation5 + $0x180] sm:$0xff]
    %v452 = vld [vmem:[#allocation5 + $0x188] sm:$0xff]
    %v453 = vld [vmem:[#allocation5 + $0x190] sm:$0xff]
    %v454 = vld [vmem:[#allocation5 + $0x198] sm:$0xff]
    %v455 = vld [vmem:[#allocation5 + $0x1a0] sm:$0xff]
    %v456 = vld [vmem:[#allocation5 + $0x1a8] sm:$0xff]
    %v457 = vld [vmem:[#allocation5 + $0x1b0] sm:$0xff]
    %v458 = vld [vmem:[#allocation5 + $0x1b8] sm:$0xff]
    %v459 = vld [vmem:[#allocation5 + $0x1c0] sm:$0xff]
    %v460 = vld [vmem:[#allocation5 + $0x1c8] sm:$0xff]
    %v461 = vld [vmem:[#allocation5 + $0x1d0] sm:$0xff]
    %v462 = vld [vmem:[#allocation5 + $0x1d8] sm:$0xff]
    %v463 = vld [vmem:[#allocation5 + $0x1e0] sm:$0xff]
    %v464 = vld [vmem:[#allocation5 + $0x1e8] sm:$0xff]
    %v465 = vld [vmem:[#allocation5 + $0x1f0] sm:$0xff]
    %v466 = vld [vmem:[#allocation5 + $0x1f8] sm:$0xff]
    %v467 = vld [vmem:[#allocation5 + $0x200] sm:$0xff]
    %v468 = vld [vmem:[#allocation5 + $0x208] sm:$0xff]
    %v469 = vld [vmem:[#allocation5 + $0x210] sm:$0xff]
    %v470 = vld [vmem:[#allocation5 + $0x218] sm:$0xff]
    %v471 = vld [vmem:[#allocation5 + $0x220] sm:$0xff]
    %v472 = vld [vmem:[#allocation5 + $0x228] sm:$0xff]
    %v473 = vld [vmem:[#allocation5 + $0x230] sm:$0xff]
    %v474 = vld [vmem:[#allocation5 + $0x238] sm:$0xff]
    %v475 = vld [vmem:[#allocation5 + $0x240] sm:$0xff]
    %v476 = vld [vmem:[#allocation5 + $0x248] sm:$0xff]
    %v477 = vld [vmem:[#allocation5 + $0x250] sm:$0xff]
    %v478 = vld [vmem:[#allocation5 + $0x258] sm:$0xff]
    %v479 = vld [vmem:[#allocation5 + $0x260] sm:$0xff]
    %v480 = vld [vmem:[#allocation5 + $0x268] sm:$0xff]
    %v481 = vld [vmem:[#allocation5 + $0x270] sm:$0xff]
    %v482 = vld [vmem:[#allocation5 + $0x278] sm:$0xff]
    %v483 = vld [vmem:[#allocation5 + $0x280] sm:$0xff]
    %v484 = vld [vmem:[#allocation5 + $0x288] sm:$0xff]
    %v485 = vld [vmem:[#allocation5 + $0x290] sm:$0xff]
    %v486 = vld [vmem:[#allocation5 + $0x298] sm:$0xff]
    %v487 = vld [vmem:[#allocation5 + $0x2a0] sm:$0xff]
    %v488 = vld [vmem:[#allocation5 + $0x2a8] sm:$0xff]
    %v489 = vld [vmem:[#allocation5 + $0x2b0] sm:$0xff]
    %v490 = vld [vmem:[#allocation5 + $0x2b8] sm:$0xff]
    %v491 = vld [vmem:[#allocation5 + $0x2c0] sm:$0xff]
    %v492 = vld [vmem:[#allocation5 + $0x2c8] sm:$0xff]
    %v493 = vld [vmem:[#allocation5 + $0x2d0] sm:$0xff]
    %v494 = vld [vmem:[#allocation5 + $0x2d8] sm:$0xff]
    %v495 = vld [vmem:[#allocation5 + $0x2e0] sm:$0xff]
    %v496 = vld [vmem:[#allocation5 + $0x2e8] sm:$0xff]
    %v497 = vld [vmem:[#allocation5 + $0x2f0] sm:$0xff]
    %v498 = vld [vmem:[#allocation5 + $0x2f8] sm:$0xff]
    %v499 = vld [vmem:[#allocation5 + $0x300] sm:$0xff]
    %v500 = vld [vmem:[#allocation5 + $0x308] sm:$0xff]
    %v501 = vld [vmem:[#allocation5 + $0x310] sm:$0xff]
    %v502 = vld [vmem:[#allocation5 + $0x318] sm:$0xff]
    %v503 = vld [vmem:[#allocation5 + $0x320] sm:$0xff]
    %v504 = vld [vmem:[#allocation5 + $0x328] sm:$0xff]
    %v505 = vld [vmem:[#allocation5 + $0x330] sm:$0xff]
    %v506 = vld [vmem:[#allocation5 + $0x338] sm:$0xff]
    %v507 = vld [vmem:[#allocation5 + $0x340] sm:$0xff]
    %v508 = vld [vmem:[#allocation5 + $0x348] sm:$0xff]
    %v509 = vld [vmem:[#allocation5 + $0x350] sm:$0xff]
    %v510 = vld [vmem:[#allocation5 + $0x358] sm:$0xff]
    %v511 = vld [vmem:[#allocation5 + $0x360] sm:$0xff]
    %v512 = vld [vmem:[#allocation5 + $0x368] sm:$0xff]
    %v513 = vld [vmem:[#allocation5 + $0x370] sm:$0xff]
    %v514 = vld [vmem:[#allocation5 + $0x378] sm:$0xff]
    %v515 = vld [vmem:[#allocation5 + $0x380] sm:$0xff]
    %v516 = vld [vmem:[#allocation5 + $0x388] sm:$0xff]
    %v517 = vld [vmem:[#allocation5 + $0x390] sm:$0xff]
    %v518 = vld [vmem:[#allocation5 + $0x398] sm:$0xff]
    %v519 = vld [vmem:[#allocation5 + $0x3a0] sm:$0xff]
    %v520 = vld [vmem:[#allocation5 + $0x3a8] sm:$0xff]
    %v521 = vld [vmem:[#allocation5 + $0x3b0] sm:$0xff]
    %v522 = vld [vmem:[#allocation5 + $0x3b8] sm:$0xff]
    %v523 = vld [vmem:[#allocation5 + $0x3c0] sm:$0xff]
    %v524 = vld [vmem:[#allocation5 + $0x3c8] sm:$0xff]
    %v525 = vld [vmem:[#allocation5 + $0x3d0] sm:$0xff]
    %v526 = vld [vmem:[#allocation5 + $0x3d8] sm:$0xff]
    %v527 = vld [vmem:[#allocation5 + $0x3e0] sm:$0xff]
    %v528 = vld [vmem:[#allocation5 + $0x3e8] sm:$0xff]
    %v529 = vld [vmem:[#allocation5 + $0x3f0] sm:$0xff]
    %v530 = vld [vmem:[#allocation5 + $0x3f8] sm:$0xff]
    %v531 = vld [vmem:[#allocation5 + $0x400] sm:$0xff]
    %v532 = vld [vmem:[#allocation5 + $0x408] sm:$0xff]
    %v533 = vld [vmem:[#allocation5 + $0x410] sm:$0xff]
    %v534 = vld [vmem:[#allocation5 + $0x418] sm:$0xff]
    %v535 = vld [vmem:[#allocation5 + $0x420] sm:$0xff]
    %v536 = vld [vmem:[#allocation5 + $0x428] sm:$0xff]
    %v537 = vld [vmem:[#allocation5 + $0x430] sm:$0xff]
    %v538 = vld [vmem:[#allocation5 + $0x438] sm:$0xff]
    %v539 = vld [vmem:[#allocation5 + $0x440] sm:$0xff]
    %v540 = vld [vmem:[#allocation5 + $0x448] sm:$0xff]
    %v541 = vld [vmem:[#allocation5 + $0x450] sm:$0xff]
    %v542 = vld [vmem:[#allocation5 + $0x458] sm:$0xff]
    %v543 = vld [vmem:[#allocation5 + $0x460] sm:$0xff]
    %v544 = vld [vmem:[#allocation5 + $0x468] sm:$0xff]
    %v545 = vld [vmem:[#allocation5 + $0x470] sm:$0xff]
    %v546 = vld [vmem:[#allocation5 + $0x478] sm:$0xff]
    %v547 = vld [vmem:[#allocation5 + $0x480] sm:$0xff]
    %v548 = vld [vmem:[#allocation5 + $0x488] sm:$0xff]
    %v549 = vld [vmem:[#allocation5 + $0x490] sm:$0xff]
    %v550 = vld [vmem:[#allocation5 + $0x498] sm:$0xff]
    %v551 = vld [vmem:[#allocation5 + $0x4a0] sm:$0xff]
    %v552 = vld [vmem:[#allocation5 + $0x4a8] sm:$0xff]
    %v553 = vld [vmem:[#allocation5 + $0x4b0] sm:$0xff]
    %v554 = vld [vmem:[#allocation5 + $0x4b8] sm:$0xff]
    %v555 = vld [vmem:[#allocation5 + $0x4c0] sm:$0xff]
    %v556 = vld [vmem:[#allocation5 + $0x4c8] sm:$0xff]
    %v557 = vld [vmem:[#allocation5 + $0x4d0] sm:$0xff]
    %v558 = vld [vmem:[#allocation5 + $0x4d8] sm:$0xff]
    %v559 = vld [vmem:[#allocation5 + $0x4e0] sm:$0xff]
    %v560 = vld [vmem:[#allocation5 + $0x4e8] sm:$0xff]
    %v561 = vld [vmem:[#allocation5 + $0x4f0] sm:$0xff]
    %v562 = vld [vmem:[#allocation5 + $0x4f8] sm:$0xff]
    %v563 = vld [vmem:[#allocation5 + $0x500] sm:$0xff]
    %v564 = vld [vmem:[#allocation5 + $0x508] sm:$0xff]
    %v565 = vld [vmem:[#allocation5 + $0x510] sm:$0xff]
    %v566 = vld [vmem:[#allocation5 + $0x518] sm:$0xff]
    %v567 = vld [vmem:[#allocation5 + $0x520] sm:$0xff]
    %v568 = vld [vmem:[#allocation5 + $0x528] sm:$0xff]
    %v569 = vld [vmem:[#allocation5 + $0x530] sm:$0xff]
    %v570 = vld [vmem:[#allocation5 + $0x538] sm:$0xff]
    %v571 = vld [vmem:[#allocation5 + $0x540] sm:$0xff]
    %v572 = vld [vmem:[#allocation5 + $0x548] sm:$0xff]
    %v573 = vld [vmem:[#allocation5 + $0x550] sm:$0xff]
    %v574 = vld [vmem:[#allocation5 + $0x558] sm:$0xff]
    %v575 = vld [vmem:[#allocation5 + $0x560] sm:$0xff]
    %v576 = vld [vmem:[#allocation5 + $0x568] sm:$0xff]
    %v577 = vld [vmem:[#allocation5 + $0x570] sm:$0xff]
    %v578 = vld [vmem:[#allocation5 + $0x578] sm:$0xff]
    %v579 = vld [vmem:[#allocation5 + $0x580] sm:$0xff]
    %v580 = vld [vmem:[#allocation5 + $0x588] sm:$0xff]
    %v581 = vld [vmem:[#allocation5 + $0x590] sm:$0xff]
    %v582 = vld [vmem:[#allocation5 + $0x598] sm:$0xff]
    %v583 = vld [vmem:[#allocation5 + $0x5a0] sm:$0xff]
    %v584 = vld [vmem:[#allocation5 + $0x5a8] sm:$0xff]
    %v585 = vld [vmem:[#allocation5 + $0x5b0] sm:$0xff]
    %v586 = vld [vmem:[#allocation5 + $0x5b8] sm:$0xff]
    %v587 = vld [vmem:[#allocation5 + $0x5c0] sm:$0xff]
    %v588 = vld [vmem:[#allocation5 + $0x5c8] sm:$0xff]
    %v589 = vld [vmem:[#allocation5 + $0x5d0] sm:$0xff]
    %v590 = vld [vmem:[#allocation5 + $0x5d8] sm:$0xff]
    %v591 = vld [vmem:[#allocation5 + $0x5e0] sm:$0xff]
    %v592 = vld [vmem:[#allocation5 + $0x5e8] sm:$0xff]
    %v593 = vld [vmem:[#allocation5 + $0x5f0] sm:$0xff]
    %v594 = vld [vmem:[#allocation5 + $0x5f8] sm:$0xff]
    %v595 = vld [vmem:[#allocation5 + $0x600] sm:$0xff]
    %v596 = vld [vmem:[#allocation5 + $0x608] sm:$0xff]
    %v597 = vld [vmem:[#allocation5 + $0x610] sm:$0xff]
    %v598 = vld [vmem:[#allocation5 + $0x618] sm:$0xff]
    %v599 = vld [vmem:[#allocation5 + $0x620] sm:$0xff]
    %v600 = vld [vmem:[#allocation5 + $0x628] sm:$0xff]
    %v601 = vld [vmem:[#allocation5 + $0x630] sm:$0xff]
    %v602 = vld [vmem:[#allocation5 + $0x638] sm:$0xff]
    %v603 = vld [vmem:[#allocation5 + $0x640] sm:$0xff]
    %v604 = vld [vmem:[#allocation5 + $0x648] sm:$0xff]
    %v605 = vld [vmem:[#allocation5 + $0x650] sm:$0xff]
    %v606 = vld [vmem:[#allocation5 + $0x658] sm:$0xff]
    %v607 = vld [vmem:[#allocation5 + $0x660] sm:$0xff]
    %v608 = vld [vmem:[#allocation5 + $0x668] sm:$0xff]
    %v609 = vld [vmem:[#allocation5 + $0x670] sm:$0xff]
    %v610 = vld [vmem:[#allocation5 + $0x678] sm:$0xff]
    %v611 = vld [vmem:[#allocation5 + $0x680] sm:$0xff]
    %v612 = vld [vmem:[#allocation5 + $0x688] sm:$0xff]
    %v613 = vld [vmem:[#allocation5 + $0x690] sm:$0xff]
    %v614 = vld [vmem:[#allocation5 + $0x698] sm:$0xff]
    %v615 = vld [vmem:[#allocation5 + $0x6a0] sm:$0xff]
    %v616 = vld [vmem:[#allocation5 + $0x6a8] sm:$0xff]
    %v617 = vld [vmem:[#allocation5 + $0x6b0] sm:$0xff]
    %v618 = vld [vmem:[#allocation5 + $0x6b8] sm:$0xff]
    %v619 = vld [vmem:[#allocation5 + $0x6c0] sm:$0xff]
    %v620 = vld [vmem:[#allocation5 + $0x6c8] sm:$0xff]
    %v621 = vld [vmem:[#allocation5 + $0x6d0] sm:$0xff]
    %v622 = vld [vmem:[#allocation5 + $0x6d8] sm:$0xff]
    %v623 = vld [vmem:[#allocation5 + $0x6e0] sm:$0xff]
    %v624 = vld [vmem:[#allocation5 + $0x6e8] sm:$0xff]
    %v625 = vld [vmem:[#allocation5 + $0x6f0] sm:$0xff]
    %v626 = vld [vmem:[#allocation5 + $0x6f8] sm:$0xff]
    %v627 = vld [vmem:[#allocation5 + $0x700] sm:$0xff]
    %v628 = vld [vmem:[#allocation5 + $0x708] sm:$0xff]
    %v629 = vld [vmem:[#allocation5 + $0x710] sm:$0xff]
    %v630 = vld [vmem:[#allocation5 + $0x718] sm:$0xff]
    %v631 = vld [vmem:[#allocation5 + $0x720] sm:$0xff]
    %v632 = vld [vmem:[#allocation5 + $0x728] sm:$0xff]
    %v633 = vld [vmem:[#allocation5 + $0x730] sm:$0xff]
    %v634 = vld [vmem:[#allocation5 + $0x738] sm:$0xff]
    %v635 = vld [vmem:[#allocation5 + $0x740] sm:$0xff]
    %v636 = vld [vmem:[#allocation5 + $0x748] sm:$0xff]
    %v637 = vld [vmem:[#allocation5 + $0x750] sm:$0xff]
    %v638 = vld [vmem:[#allocation5 + $0x758] sm:$0xff]
    %v639 = vld [vmem:[#allocation5 + $0x760] sm:$0xff]
    %v640 = vld [vmem:[#allocation5 + $0x768] sm:$0xff]
    %v641 = vld [vmem:[#allocation5 + $0x770] sm:$0xff]
    %v642 = vld [vmem:[#allocation5 + $0x778] sm:$0xff]
    %v643 = vld [vmem:[#allocation5 + $0x780] sm:$0xff]
    %v644 = vld [vmem:[#allocation5 + $0x788] sm:$0xff]
    %v645 = vld [vmem:[#allocation5 + $0x790] sm:$0xff]
    %v646 = vld [vmem:[#allocation5 + $0x798] sm:$0xff]
    %v647 = vld [vmem:[#allocation5 + $0x7a0] sm:$0xff]
    %v648 = vld [vmem:[#allocation5 + $0x7a8] sm:$0xff]
    %v649 = vld [vmem:[#allocation5 + $0x7b0] sm:$0xff]
    %v650 = vld [vmem:[#allocation5 + $0x7b8] sm:$0xff]
    %v651 = vld [vmem:[#allocation5 + $0x7c0] sm:$0xff]
    %v652 = vld [vmem:[#allocation5 + $0x7c8] sm:$0xff]
    %v653 = vld [vmem:[#allocation7] sm:$0xf]
    %v655 = vperm.slane %v653, 0
    %v656 = vperm.slane %v653, 1
    %v657 = vperm.slane %v653, 2
    %v658 = vperm.slane %v653, 3
    %v913 = vunpack.c.l.b16 %v403
    %v914 = vunpack.c.h.b16 %v403
    %v915 = vunpack.c.l.b16 %v404
    %v916 = vunpack.c.h.b16 %v404
    %v917 = vunpack.c.l.b16 %v405
    %v918 = vunpack.c.h.b16 %v405
    %v919 = vunpack.c.l.b16 %v406
    %v920 = vunpack.c.h.b16 %v406
    %v921 = vunpack.c.l.b16 %v407
    %v922 = vunpack.c.h.b16 %v407
    %v923 = vunpack.c.l.b16 %v408
    %v924 = vunpack.c.h.b16 %v408
    %v925 = vunpack.c.l.b16 %v409
    %v926 = vunpack.c.h.b16 %v409
    %v927 = vunpack.c.l.b16 %v410
    %v928 = vunpack.c.h.b16 %v410
    %v929 = vunpack.c.l.b16 %v411
    %v930 = vunpack.c.h.b16 %v411
    %v931 = vunpack.c.l.b16 %v412
    %v932 = vunpack.c.h.b16 %v412
    %v933 = vunpack.c.l.b16 %v413
    %v934 = vunpack.c.h.b16 %v413
    %v935 = vunpack.c.l.b16 %v414
    %v936 = vunpack.c.h.b16 %v414
    %v937 = vunpack.c.l.b16 %v415
    %v938 = vunpack.c.h.b16 %v415
    %v939 = vunpack.c.l.b16 %v416
    %v940 = vunpack.c.h.b16 %v416
    %v941 = vunpack.c.l.b16 %v417
    %v942 = vunpack.c.h.b16 %v417
    %v943 = vunpack.c.l.b16 %v418
    %v944 = vunpack.c.h.b16 %v418
    %v945 = vunpack.c.l.b16 %v419
    %v946 = vunpack.c.h.b16 %v419
    %v947 = vunpack.c.l.b16 %v420
    %v948 = vunpack.c.h.b16 %v420
    %v949 = vunpack.c.l.b16 %v421
    %v950 = vunpack.c.h.b16 %v421
    %v951 = vunpack.c.l.b16 %v422
    %v952 = vunpack.c.h.b16 %v422
    %v953 = vunpack.c.l.b16 %v423
    %v954 = vunpack.c.h.b16 %v423
    %v955 = vunpack.c.l.b16 %v424
    %v956 = vunpack.c.h.b16 %v424
    %v957 = vunpack.c.l.b16 %v425
    %v958 = vunpack.c.h.b16 %v425
    %v959 = vunpack.c.l.b16 %v426
    %v960 = vunpack.c.h.b16 %v426
    %v961 = vunpack.c.l.b16 %v427
    %v962 = vunpack.c.h.b16 %v427
    %v963 = vunpack.c.l.b16 %v428
    %v964 = vunpack.c.h.b16 %v428
    %v965 = vunpack.c.l.b16 %v429
    %v966 = vunpack.c.h.b16 %v429
    %v967 = vunpack.c.l.b16 %v430
    %v968 = vunpack.c.h.b16 %v430
    %v969 = vunpack.c.l.b16 %v431
    %v970 = vunpack.c.h.b16 %v431
    %v971 = vunpack.c.l.b16 %v432
    %v972 = vunpack.c.h.b16 %v432
    %v973 = vunpack.c.l.b16 %v433
    %v974 = vunpack.c.h.b16 %v433
    %v975 = vunpack.c.l.b16 %v434
    %v976 = vunpack.c.h.b16 %v434
    %v977 = vunpack.c.l.b16 %v435
    %v978 = vunpack.c.h.b16 %v435
    %v979 = vunpack.c.l.b16 %v436
    %v980 = vunpack.c.h.b16 %v436
    %v981 = vunpack.c.l.b16 %v437
    %v982 = vunpack.c.h.b16 %v437
    %v983 = vunpack.c.l.b16 %v438
    %v984 = vunpack.c.h.b16 %v438
    %v985 = vunpack.c.l.b16 %v439
    %v986 = vunpack.c.h.b16 %v439
    %v987 = vunpack.c.l.b16 %v440
    %v988 = vunpack.c.h.b16 %v440
    %v989 = vunpack.c.l.b16 %v441
    %v990 = vunpack.c.h.b16 %v441
    %v991 = vunpack.c.l.b16 %v442
    %v992 = vunpack.c.h.b16 %v442
    %v993 = vunpack.c.l.b16 %v443
    %v994 = vunpack.c.h.b16 %v443
    %v995 = vunpack.c.l.b16 %v444
    %v996 = vunpack.c.h.b16 %v444
    %v997 = vunpack.c.l.b16 %v445
    %v998 = vunpack.c.h.b16 %v445
    %v999 = vunpack.c.l.b16 %v446
    %v1000 = vunpack.c.h.b16 %v446
    %v1001 = vunpack.c.l.b16 %v447
    %v1002 = vunpack.c.h.b16 %v447
    %v1003 = vunpack.c.l.b16 %v448
    %v1004 = vunpack.c.h.b16 %v448
    %v1005 = vunpack.c.l.b16 %v449
    %v1006 = vunpack.c.h.b16 %v449
    %v1007 = vunpack.c.l.b16 %v450
    %v1008 = vunpack.c.h.b16 %v450
    %v1009 = vunpack.c.l.b16 %v451
    %v1010 = vunpack.c.h.b16 %v451
    %v1011 = vunpack.c.l.b16 %v452
    %v1012 = vunpack.c.h.b16 %v452
    %v1013 = vunpack.c.l.b16 %v453
    %v1014 = vunpack.c.h.b16 %v453
    %v1015 = vunpack.c.l.b16 %v454
    %v1016 = vunpack.c.h.b16 %v454
    %v1017 = vunpack.c.l.b16 %v455
    %v1018 = vunpack.c.h.b16 %v455
    %v1019 = vunpack.c.l.b16 %v456
    %v1020 = vunpack.c.h.b16 %v456
    %v1021 = vunpack.c.l.b16 %v457
    %v1022 = vunpack.c.h.b16 %v457
    %v1023 = vunpack.c.l.b16 %v458
    %v1024 = vunpack.c.h.b16 %v458
    %v1025 = vunpack.c.l.b16 %v459
    %v1026 = vunpack.c.h.b16 %v459
    %v1027 = vunpack.c.l.b16 %v460
    %v1028 = vunpack.c.h.b16 %v460
    %v1029 = vunpack.c.l.b16 %v461
    %v1030 = vunpack.c.h.b16 %v461
    %v1031 = vunpack.c.l.b16 %v462
    %v1032 = vunpack.c.h.b16 %v462
    %v1033 = vunpack.c.l.b16 %v463
    %v1034 = vunpack.c.h.b16 %v463
    %v1035 = vunpack.c.l.b16 %v464
    %v1036 = vunpack.c.h.b16 %v464
    %v1037 = vunpack.c.l.b16 %v465
    %v1038 = vunpack.c.h.b16 %v465
    %v1039 = vunpack.c.l.b16 %v466
    %v1040 = vunpack.c.h.b16 %v466
    %v1041 = vunpack.c.l.b16 %v467
    %v1042 = vunpack.c.h.b16 %v467
    %v1043 = vunpack.c.l.b16 %v468
    %v1044 = vunpack.c.h.b16 %v468
    %v1045 = vunpack.c.l.b16 %v469
    %v1046 = vunpack.c.h.b16 %v469
    %v1047 = vunpack.c.l.b16 %v470
    %v1048 = vunpack.c.h.b16 %v470
    %v1049 = vunpack.c.l.b16 %v471
    %v1050 = vunpack.c.h.b16 %v471
    %v1051 = vunpack.c.l.b16 %v472
    %v1052 = vunpack.c.h.b16 %v472
    %v1053 = vunpack.c.l.b16 %v473
    %v1054 = vunpack.c.h.b16 %v473
    %v1055 = vunpack.c.l.b16 %v474
    %v1056 = vunpack.c.h.b16 %v474
    %v1057 = vunpack.c.l.b16 %v475
    %v1058 = vunpack.c.h.b16 %v475
    %v1059 = vunpack.c.l.b16 %v476
    %v1060 = vunpack.c.h.b16 %v476
    %v1061 = vunpack.c.l.b16 %v477
    %v1062 = vunpack.c.h.b16 %v477
    %v1063 = vunpack.c.l.b16 %v478
    %v1064 = vunpack.c.h.b16 %v478
    %v1065 = vunpack.c.l.b16 %v479
    %v1066 = vunpack.c.h.b16 %v479
    %v1067 = vunpack.c.l.b16 %v480
    %v1068 = vunpack.c.h.b16 %v480
    %v1069 = vunpack.c.l.b16 %v481
    %v1070 = vunpack.c.h.b16 %v481
    %v1071 = vunpack.c.l.b16 %v482
    %v1072 = vunpack.c.h.b16 %v482
    %v1073 = vunpack.c.l.b16 %v483
    %v1074 = vunpack.c.h.b16 %v483
    %v1075 = vunpack.c.l.b16 %v484
    %v1076 = vunpack.c.h.b16 %v484
    %v1077 = vunpack.c.l.b16 %v485
    %v1078 = vunpack.c.h.b16 %v485
    %v1079 = vunpack.c.l.b16 %v486
    %v1080 = vunpack.c.h.b16 %v486
    %v1081 = vunpack.c.l.b16 %v487
    %v1082 = vunpack.c.h.b16 %v487
    %v1083 = vunpack.c.l.b16 %v488
    %v1084 = vunpack.c.h.b16 %v488
    %v1085 = vunpack.c.l.b16 %v489
    %v1086 = vunpack.c.h.b16 %v489
    %v1087 = vunpack.c.l.b16 %v490
    %v1088 = vunpack.c.h.b16 %v490
    %v1089 = vunpack.c.l.b16 %v491
    %v1090 = vunpack.c.h.b16 %v491
    %v1091 = vunpack.c.l.b16 %v492
    %v1092 = vunpack.c.h.b16 %v492
    %v1093 = vunpack.c.l.b16 %v493
    %v1094 = vunpack.c.h.b16 %v493
    %v1095 = vunpack.c.l.b16 %v494
    %v1096 = vunpack.c.h.b16 %v494
    %v1097 = vunpack.c.l.b16 %v495
    %v1098 = vunpack.c.h.b16 %v495
    %v1099 = vunpack.c.l.b16 %v496
    %v1100 = vunpack.c.h.b16 %v496
    %v1101 = vunpack.c.l.b16 %v497
    %v1102 = vunpack.c.h.b16 %v497
    %v1103 = vunpack.c.l.b16 %v498
    %v1104 = vunpack.c.h.b16 %v498
    %v1105 = vunpack.c.l.b16 %v499
    %v1106 = vunpack.c.h.b16 %v499
    %v1107 = vunpack.c.l.b16 %v500
    %v1108 = vunpack.c.h.b16 %v500
    %v1109 = vunpack.c.l.b16 %v501
    %v1110 = vunpack.c.h.b16 %v501
    %v1111 = vunpack.c.l.b16 %v502
    %v1112 = vunpack.c.h.b16 %v502
    %v1113 = vunpack.c.l.b16 %v503
    %v1114 = vunpack.c.h.b16 %v503
    %v1115 = vunpack.c.l.b16 %v504
    %v1116 = vunpack.c.h.b16 %v504
    %v1117 = vunpack.c.l.b16 %v505
    %v1118 = vunpack.c.h.b16 %v505
    %v1119 = vunpack.c.l.b16 %v506
    %v1120 = vunpack.c.h.b16 %v506
    %v1121 = vunpack.c.l.b16 %v507
    %v1122 = vunpack.c.h.b16 %v507
    %v1123 = vunpack.c.l.b16 %v508
    %v1124 = vunpack.c.h.b16 %v508
    %v1125 = vunpack.c.l.b16 %v509
    %v1126 = vunpack.c.h.b16 %v509
    %v1127 = vunpack.c.l.b16 %v510
    %v1128 = vunpack.c.h.b16 %v510
    %v1129 = vunpack.c.l.b16 %v511
    %v1130 = vunpack.c.h.b16 %v511
    %v1131 = vunpack.c.l.b16 %v512
    %v1132 = vunpack.c.h.b16 %v512
    %v1133 = vunpack.c.l.b16 %v513
    %v1134 = vunpack.c.h.b16 %v513
    %v1135 = vunpack.c.l.b16 %v514
    %v1136 = vunpack.c.h.b16 %v514
    %v1137 = vunpack.c.l.b16 %v515
    %v1138 = vunpack.c.h.b16 %v515
    %v1139 = vunpack.c.l.b16 %v516
    %v1140 = vunpack.c.h.b16 %v516
    %v1141 = vunpack.c.l.b16 %v517
    %v1142 = vunpack.c.h.b16 %v517
    %v1143 = vunpack.c.l.b16 %v518
    %v1144 = vunpack.c.h.b16 %v518
    %v1145 = vunpack.c.l.b16 %v519
    %v1146 = vunpack.c.h.b16 %v519
    %v1147 = vunpack.c.l.b16 %v520
    %v1148 = vunpack.c.h.b16 %v520
    %v1149 = vunpack.c.l.b16 %v521
    %v1150 = vunpack.c.h.b16 %v521
    %v1151 = vunpack.c.l.b16 %v522
    %v1152 = vunpack.c.h.b16 %v522
    %v1153 = vunpack.c.l.b16 %v523
    %v1154 = vunpack.c.h.b16 %v523
    %v1155 = vunpack.c.l.b16 %v524
    %v1156 = vunpack.c.h.b16 %v524
    %v1157 = vunpack.c.l.b16 %v525
    %v1158 = vunpack.c.h.b16 %v525
    %v1159 = vunpack.c.l.b16 %v526
    %v1160 = vunpack.c.h.b16 %v526
    %v1161 = vunpack.c.l.b16 %v527
    %v1162 = vunpack.c.h.b16 %v527
    %v1163 = vunpack.c.l.b16 %v528
    %v1164 = vunpack.c.h.b16 %v528
    %v1165 = vunpack.c.l.b16 %v529
    %v1166 = vunpack.c.h.b16 %v529
    %v1167 = vunpack.c.l.b16 %v530
    %v1168 = vunpack.c.h.b16 %v530
    %v1169 = vunpack.c.l.b16 %v531
    %v1170 = vunpack.c.h.b16 %v531
    %v1171 = vunpack.c.l.b16 %v532
    %v1172 = vunpack.c.h.b16 %v532
    %v1173 = vunpack.c.l.b16 %v533
    %v1174 = vunpack.c.h.b16 %v533
    %v1175 = vunpack.c.l.b16 %v534
    %v1176 = vunpack.c.h.b16 %v534
    %v1177 = vunpack.c.l.b16 %v535
    %v1178 = vunpack.c.h.b16 %v535
    %v1179 = vunpack.c.l.b16 %v536
    %v1180 = vunpack.c.h.b16 %v536
    %v1181 = vunpack.c.l.b16 %v537
    %v1182 = vunpack.c.h.b16 %v537
    %v1183 = vunpack.c.l.b16 %v538
    %v1184 = vunpack.c.h.b16 %v538
    %v1185 = vunpack.c.l.b16 %v539
    %v1186 = vunpack.c.h.b16 %v539
    %v1187 = vunpack.c.l.b16 %v540
    %v1188 = vunpack.c.h.b16 %v540
    %v1189 = vunpack.c.l.b16 %v541
    %v1190 = vunpack.c.h.b16 %v541
    %v1191 = vunpack.c.l.b16 %v542
    %v1192 = vunpack.c.h.b16 %v542
    %v1193 = vunpack.c.l.b16 %v543
    %v1194 = vunpack.c.h.b16 %v543
    %v1195 = vunpack.c.l.b16 %v544
    %v1196 = vunpack.c.h.b16 %v544
    %v1197 = vunpack.c.l.b16 %v545
    %v1198 = vunpack.c.h.b16 %v545
    %v1199 = vunpack.c.l.b16 %v546
    %v1200 = vunpack.c.h.b16 %v546
    %v1201 = vunpack.c.l.b16 %v547
    %v1202 = vunpack.c.h.b16 %v547
    %v1203 = vunpack.c.l.b16 %v548
    %v1204 = vunpack.c.h.b16 %v548
    %v1205 = vunpack.c.l.b16 %v549
    %v1206 = vunpack.c.h.b16 %v549
    %v1207 = vunpack.c.l.b16 %v550
    %v1208 = vunpack.c.h.b16 %v550
    %v1209 = vunpack.c.l.b16 %v551
    %v1210 = vunpack.c.h.b16 %v551
    %v1211 = vunpack.c.l.b16 %v552
    %v1212 = vunpack.c.h.b16 %v552
    %v1213 = vunpack.c.l.b16 %v553
    %v1214 = vunpack.c.h.b16 %v553
    %v1215 = vunpack.c.l.b16 %v554
    %v1216 = vunpack.c.h.b16 %v554
    %v1217 = vunpack.c.l.b16 %v555
    %v1218 = vunpack.c.h.b16 %v555
    %v1219 = vunpack.c.l.b16 %v556
    %v1220 = vunpack.c.h.b16 %v556
    %v1221 = vunpack.c.l.b16 %v557
    %v1222 = vunpack.c.h.b16 %v557
    %v1223 = vunpack.c.l.b16 %v558
    %v1224 = vunpack.c.h.b16 %v558
    %v1225 = vunpack.c.l.b16 %v559
    %v1226 = vunpack.c.h.b16 %v559
    %v1227 = vunpack.c.l.b16 %v560
    %v1228 = vunpack.c.h.b16 %v560
    %v1229 = vunpack.c.l.b16 %v561
    %v1230 = vunpack.c.h.b16 %v561
    %v1231 = vunpack.c.l.b16 %v562
    %v1232 = vunpack.c.h.b16 %v562
    %v1233 = vunpack.c.l.b16 %v563
    %v1234 = vunpack.c.h.b16 %v563
    %v1235 = vunpack.c.l.b16 %v564
    %v1236 = vunpack.c.h.b16 %v564
    %v1237 = vunpack.c.l.b16 %v565
    %v1238 = vunpack.c.h.b16 %v565
    %v1239 = vunpack.c.l.b16 %v566
    %v1240 = vunpack.c.h.b16 %v566
    %v1241 = vunpack.c.l.b16 %v567
    %v1242 = vunpack.c.h.b16 %v567
    %v1243 = vunpack.c.l.b16 %v568
    %v1244 = vunpack.c.h.b16 %v568
    %v1245 = vunpack.c.l.b16 %v569
    %v1246 = vunpack.c.h.b16 %v569
    %v1247 = vunpack.c.l.b16 %v570
    %v1248 = vunpack.c.h.b16 %v570
    %v1249 = vunpack.c.l.b16 %v571
    %v1250 = vunpack.c.h.b16 %v571
    %v1251 = vunpack.c.l.b16 %v572
    %v1252 = vunpack.c.h.b16 %v572
    %v1253 = vunpack.c.l.b16 %v573
    %v1254 = vunpack.c.h.b16 %v573
    %v1255 = vunpack.c.l.b16 %v574
    %v1256 = vunpack.c.h.b16 %v574
    %v1257 = vunpack.c.l.b16 %v575
    %v1258 = vunpack.c.h.b16 %v575
    %v1259 = vunpack.c.l.b16 %v576
    %v1260 = vunpack.c.h.b16 %v576
    %v1261 = vunpack.c.l.b16 %v577
    %v1262 = vunpack.c.h.b16 %v577
    %v1263 = vunpack.c.l.b16 %v578
    %v1264 = vunpack.c.h.b16 %v578
    %v1265 = vunpack.c.l.b16 %v579
    %v1266 = vunpack.c.h.b16 %v579
    %v1267 = vunpack.c.l.b16 %v580
    %v1268 = vunpack.c.h.b16 %v580
    %v1269 = vunpack.c.l.b16 %v581
    %v1270 = vunpack.c.h.b16 %v581
    %v1271 = vunpack.c.l.b16 %v582
    %v1272 = vunpack.c.h.b16 %v582
    %v1273 = vunpack.c.l.b16 %v583
    %v1274 = vunpack.c.h.b16 %v583
    %v1275 = vunpack.c.l.b16 %v584
    %v1276 = vunpack.c.h.b16 %v584
    %v1277 = vunpack.c.l.b16 %v585
    %v1278 = vunpack.c.h.b16 %v585
    %v1279 = vunpack.c.l.b16 %v586
    %v1280 = vunpack.c.h.b16 %v586
    %v1281 = vunpack.c.l.b16 %v587
    %v1282 = vunpack.c.h.b16 %v587
    %v1283 = vunpack.c.l.b16 %v588
    %v1284 = vunpack.c.h.b16 %v588
    %v1285 = vunpack.c.l.b16 %v589
    %v1286 = vunpack.c.h.b16 %v589
    %v1287 = vunpack.c.l.b16 %v590
    %v1288 = vunpack.c.h.b16 %v590
    %v1289 = vunpack.c.l.b16 %v591
    %v1290 = vunpack.c.h.b16 %v591
    %v1291 = vunpack.c.l.b16 %v592
    %v1292 = vunpack.c.h.b16 %v592
    %v1293 = vunpack.c.l.b16 %v593
    %v1294 = vunpack.c.h.b16 %v593
    %v1295 = vunpack.c.l.b16 %v594
    %v1296 = vunpack.c.h.b16 %v594
    %v1297 = vunpack.c.l.b16 %v595
    %v1298 = vunpack.c.h.b16 %v595
    %v1299 = vunpack.c.l.b16 %v596
    %v1300 = vunpack.c.h.b16 %v596
    %v1301 = vunpack.c.l.b16 %v597
    %v1302 = vunpack.c.h.b16 %v597
    %v1303 = vunpack.c.l.b16 %v598
    %v1304 = vunpack.c.h.b16 %v598
    %v1305 = vunpack.c.l.b16 %v599
    %v1306 = vunpack.c.h.b16 %v599
    %v1307 = vunpack.c.l.b16 %v600
    %v1308 = vunpack.c.h.b16 %v600
    %v1309 = vunpack.c.l.b16 %v601
    %v1310 = vunpack.c.h.b16 %v601
    %v1311 = vunpack.c.l.b16 %v602
    %v1312 = vunpack.c.h.b16 %v602
    %v1313 = vunpack.c.l.b16 %v603
    %v1314 = vunpack.c.h.b16 %v603
    %v1315 = vunpack.c.l.b16 %v604
    %v1316 = vunpack.c.h.b16 %v604
    %v1317 = vunpack.c.l.b16 %v605
    %v1318 = vunpack.c.h.b16 %v605
    %v1319 = vunpack.c.l.b16 %v606
    %v1320 = vunpack.c.h.b16 %v606
    %v1321 = vunpack.c.l.b16 %v607
    %v1322 = vunpack.c.h.b16 %v607
    %v1323 = vunpack.c.l.b16 %v608
    %v1324 = vunpack.c.h.b16 %v608
    %v1325 = vunpack.c.l.b16 %v609
    %v1326 = vunpack.c.h.b16 %v609
    %v1327 = vunpack.c.l.b16 %v610
    %v1328 = vunpack.c.h.b16 %v610
    %v1329 = vunpack.c.l.b16 %v611
    %v1330 = vunpack.c.h.b16 %v611
    %v1331 = vunpack.c.l.b16 %v612
    %v1332 = vunpack.c.h.b16 %v612
    %v1333 = vunpack.c.l.b16 %v613
    %v1334 = vunpack.c.h.b16 %v613
    %v1335 = vunpack.c.l.b16 %v614
    %v1336 = vunpack.c.h.b16 %v614
    %v1337 = vunpack.c.l.b16 %v615
    %v1338 = vunpack.c.h.b16 %v615
    %v1339 = vunpack.c.l.b16 %v616
    %v1340 = vunpack.c.h.b16 %v616
    %v1341 = vunpack.c.l.b16 %v617
    %v1342 = vunpack.c.h.b16 %v617
    %v1343 = vunpack.c.l.b16 %v618
    %v1344 = vunpack.c.h.b16 %v618
    %v1345 = vunpack.c.l.b16 %v619
    %v1346 = vunpack.c.h.b16 %v619
    %v1347 = vunpack.c.l.b16 %v620
    %v1348 = vunpack.c.h.b16 %v620
    %v1349 = vunpack.c.l.b16 %v621
    %v1350 = vunpack.c.h.b16 %v621
    %v1351 = vunpack.c.l.b16 %v622
    %v1352 = vunpack.c.h.b16 %v622
    %v1353 = vunpack.c.l.b16 %v623
    %v1354 = vunpack.c.h.b16 %v623
    %v1355 = vunpack.c.l.b16 %v624
    %v1356 = vunpack.c.h.b16 %v624
    %v1357 = vunpack.c.l.b16 %v625
    %v1358 = vunpack.c.h.b16 %v625
    %v1359 = vunpack.c.l.b16 %v626
    %v1360 = vunpack.c.h.b16 %v626
    %v1361 = vunpack.c.l.b16 %v627
    %v1362 = vunpack.c.h.b16 %v627
    %v1363 = vunpack.c.l.b16 %v628
    %v1364 = vunpack.c.h.b16 %v628
    %v1365 = vunpack.c.l.b16 %v629
    %v1366 = vunpack.c.h.b16 %v629
    %v1367 = vunpack.c.l.b16 %v630
    %v1368 = vunpack.c.h.b16 %v630
    %v1369 = vunpack.c.l.b16 %v631
    %v1370 = vunpack.c.h.b16 %v631
    %v1371 = vunpack.c.l.b16 %v632
    %v1372 = vunpack.c.h.b16 %v632
    %v1373 = vunpack.c.l.b16 %v633
    %v1374 = vunpack.c.h.b16 %v633
    %v1375 = vunpack.c.l.b16 %v634
    %v1376 = vunpack.c.h.b16 %v634
    %v1377 = vunpack.c.l.b16 %v635
    %v1378 = vunpack.c.h.b16 %v635
    %v1379 = vunpack.c.l.b16 %v636
    %v1380 = vunpack.c.h.b16 %v636
    %v1381 = vunpack.c.l.b16 %v637
    %v1382 = vunpack.c.h.b16 %v637
    %v1383 = vunpack.c.l.b16 %v638
    %v1384 = vunpack.c.h.b16 %v638
    %v1385 = vunpack.c.l.b16 %v639
    %v1386 = vunpack.c.h.b16 %v639
    %v1387 = vunpack.c.l.b16 %v640
    %v1388 = vunpack.c.h.b16 %v640
    %v1389 = vunpack.c.l.b16 %v641
    %v1390 = vunpack.c.h.b16 %v641
    %v1391 = vunpack.c.l.b16 %v642
    %v1392 = vunpack.c.h.b16 %v642
    %v1393 = vunpack.c.l.b16 %v643
    %v1394 = vunpack.c.h.b16 %v643
    %v1395 = vunpack.c.l.b16 %v644
    %v1396 = vunpack.c.h.b16 %v644
    %v1397 = vunpack.c.l.b16 %v645
    %v1398 = vunpack.c.h.b16 %v645
    %v1399 = vunpack.c.l.b16 %v646
    %v1400 = vunpack.c.h.b16 %v646
    %v1401 = vunpack.c.l.b16 %v647
    %v1402 = vunpack.c.h.b16 %v647
    %v1403 = vunpack.c.l.b16 %v648
    %v1404 = vunpack.c.h.b16 %v648
    %v1405 = vunpack.c.l.b16 %v649
    %v1406 = vunpack.c.h.b16 %v649
    %v1407 = vunpack.c.l.b16 %v650
    %v1408 = vunpack.c.h.b16 %v650
    %v1409 = vunpack.c.l.b16 %v651
    %v1410 = vunpack.c.h.b16 %v651
    %v1411 = vunpack.c.l.b16 %v652
    %v1412 = vunpack.c.h.b16 %v652
    %v1413 = vpack.c.b16 %v917, %v913
    %v1414 = vpack.c.b16 %v918, %v914
    %v1415 = vpack.c.b16 %v919, %v915
    %v1416 = vpack.c.b16 %v920, %v916
    %v1417 = vpack.c.b16 %v925, %v921
    %v1418 = vpack.c.b16 %v926, %v922
    %v1419 = vpack.c.b16 %v927, %v923
    %v1420 = vpack.c.b16 %v928, %v924
    %v1421 = vpack.c.b16 %v933, %v929
    %v1422 = vpack.c.b16 %v934, %v930
    %v1423 = vpack.c.b16 %v935, %v931
    %v1424 = vpack.c.b16 %v936, %v932
    %v1425 = vpack.c.b16 %v941, %v937
    %v1426 = vpack.c.b16 %v942, %v938
    %v1427 = vpack.c.b16 %v943, %v939
    %v1428 = vpack.c.b16 %v944, %v940
    %v1429 = vpack.c.b16 %v949, %v945
    %v1430 = vpack.c.b16 %v950, %v946
    %v1431 = vpack.c.b16 %v951, %v947
    %v1432 = vpack.c.b16 %v952, %v948
    %v1433 = vpack.c.b16 %v957, %v953
    %v1434 = vpack.c.b16 %v958, %v954
    %v1435 = vpack.c.b16 %v959, %v955
    %v1436 = vpack.c.b16 %v960, %v956
    %v1437 = vpack.c.b16 %v965, %v961
    %v1438 = vpack.c.b16 %v966, %v962
    %v1439 = vpack.c.b16 %v967, %v963
    %v1440 = vpack.c.b16 %v968, %v964
    %v1441 = vpack.c.b16 %v973, %v969
    %v1442 = vpack.c.b16 %v974, %v970
    %v1443 = vpack.c.b16 %v975, %v971
    %v1444 = vpack.c.b16 %v976, %v972
    %v1445 = vpack.c.b16 %v981, %v977
    %v1446 = vpack.c.b16 %v982, %v978
    %v1447 = vpack.c.b16 %v983, %v979
    %v1448 = vpack.c.b16 %v984, %v980
    %v1449 = vpack.c.b16 %v989, %v985
    %v1450 = vpack.c.b16 %v990, %v986
    %v1451 = vpack.c.b16 %v991, %v987
    %v1452 = vpack.c.b16 %v992, %v988
    %v1453 = vpack.c.b16 %v997, %v993
    %v1454 = vpack.c.b16 %v998, %v994
    %v1455 = vpack.c.b16 %v999, %v995
    %v1456 = vpack.c.b16 %v1000, %v996
    %v1457 = vpack.c.b16 %v1005, %v1001
    %v1458 = vpack.c.b16 %v1006, %v1002
    %v1459 = vpack.c.b16 %v1007, %v1003
    %v1460 = vpack.c.b16 %v1008, %v1004
    %v1461 = vpack.c.b16 %v1013, %v1009
    %v1462 = vpack.c.b16 %v1014, %v1010
    %v1463 = vpack.c.b16 %v1015, %v1011
    %v1464 = vpack.c.b16 %v1016, %v1012
    %v1465 = vpack.c.b16 %v1021, %v1017
    %v1466 = vpack.c.b16 %v1022, %v1018
    %v1467 = vpack.c.b16 %v1023, %v1019
    %v1468 = vpack.c.b16 %v1024, %v1020
    %v1469 = vpack.c.b16 %v1029, %v1025
    %v1470 = vpack.c.b16 %v1030, %v1026
    %v1471 = vpack.c.b16 %v1031, %v1027
    %v1472 = vpack.c.b16 %v1032, %v1028
    %v1473 = vpack.c.b16 %v1037, %v1033
    %v1474 = vpack.c.b16 %v1038, %v1034
    %v1475 = vpack.c.b16 %v1039, %v1035
    %v1476 = vpack.c.b16 %v1040, %v1036
    %v1477 = vpack.c.b16 %v1045, %v1041
    %v1478 = vpack.c.b16 %v1046, %v1042
    %v1479 = vpack.c.b16 %v1047, %v1043
    %v1480 = vpack.c.b16 %v1048, %v1044
    %v1481 = vpack.c.b16 %v1053, %v1049
    %v1482 = vpack.c.b16 %v1054, %v1050
    %v1483 = vpack.c.b16 %v1055, %v1051
    %v1484 = vpack.c.b16 %v1056, %v1052
    %v1485 = vpack.c.b16 %v1061, %v1057
    %v1486 = vpack.c.b16 %v1062, %v1058
    %v1487 = vpack.c.b16 %v1063, %v1059
    %v1488 = vpack.c.b16 %v1064, %v1060
    %v1489 = vpack.c.b16 %v1069, %v1065
    %v1490 = vpack.c.b16 %v1070, %v1066
    %v1491 = vpack.c.b16 %v1071, %v1067
    %v1492 = vpack.c.b16 %v1072, %v1068
    %v1493 = vpack.c.b16 %v1077, %v1073
    %v1494 = vpack.c.b16 %v1078, %v1074
    %v1495 = vpack.c.b16 %v1079, %v1075
    %v1496 = vpack.c.b16 %v1080, %v1076
    %v1497 = vpack.c.b16 %v1085, %v1081
    %v1498 = vpack.c.b16 %v1086, %v1082
    %v1499 = vpack.c.b16 %v1087, %v1083
    %v1500 = vpack.c.b16 %v1088, %v1084
    %v1501 = vpack.c.b16 %v1093, %v1089
    %v1502 = vpack.c.b16 %v1094, %v1090
    %v1503 = vpack.c.b16 %v1095, %v1091
    %v1504 = vpack.c.b16 %v1096, %v1092
    %v1505 = vpack.c.b16 %v1101, %v1097
    %v1506 = vpack.c.b16 %v1102, %v1098
    %v1507 = vpack.c.b16 %v1103, %v1099
    %v1508 = vpack.c.b16 %v1104, %v1100
    %v1509 = vpack.c.b16 %v1109, %v1105
    %v1510 = vpack.c.b16 %v1110, %v1106
    %v1511 = vpack.c.b16 %v1111, %v1107
    %v1512 = vpack.c.b16 %v1112, %v1108
    %v1513 = vpack.c.b16 %v1117, %v1113
    %v1514 = vpack.c.b16 %v1118, %v1114
    %v1515 = vpack.c.b16 %v1119, %v1115
    %v1516 = vpack.c.b16 %v1120, %v1116
    %v1517 = vpack.c.b16 %v1125, %v1121
    %v1518 = vpack.c.b16 %v1126, %v1122
    %v1519 = vpack.c.b16 %v1127, %v1123
    %v1520 = vpack.c.b16 %v1128, %v1124
    %v1521 = vpack.c.b16 %v1133, %v1129
    %v1522 = vpack.c.b16 %v1134, %v1130
    %v1523 = vpack.c.b16 %v1135, %v1131
    %v1524 = vpack.c.b16 %v1136, %v1132
    %v1525 = vpack.c.b16 %v1141, %v1137
    %v1526 = vpack.c.b16 %v1142, %v1138
    %v1527 = vpack.c.b16 %v1143, %v1139
    %v1528 = vpack.c.b16 %v1144, %v1140
    %v1529 = vpack.c.b16 %v1149, %v1145
    %v1530 = vpack.c.b16 %v1150, %v1146
    %v1531 = vpack.c.b16 %v1151, %v1147
    %v1532 = vpack.c.b16 %v1152, %v1148
    %v1533 = vpack.c.b16 %v1157, %v1153
    %v1534 = vpack.c.b16 %v1158, %v1154
    %v1535 = vpack.c.b16 %v1159, %v1155
    %v1536 = vpack.c.b16 %v1160, %v1156
    %v1537 = vpack.c.b16 %v1165, %v1161
    %v1538 = vpack.c.b16 %v1166, %v1162
    %v1539 = vpack.c.b16 %v1167, %v1163
    %v1540 = vpack.c.b16 %v1168, %v1164
    %v1541 = vpack.c.b16 %v1173, %v1169
    %v1542 = vpack.c.b16 %v1174, %v1170
    %v1543 = vpack.c.b16 %v1175, %v1171
    %v1544 = vpack.c.b16 %v1176, %v1172
    %v1545 = vpack.c.b16 %v1181, %v1177
    %v1546 = vpack.c.b16 %v1182, %v1178
    %v1547 = vpack.c.b16 %v1183, %v1179
    %v1548 = vpack.c.b16 %v1184, %v1180
    %v1549 = vpack.c.b16 %v1189, %v1185
    %v1550 = vpack.c.b16 %v1190, %v1186
    %v1551 = vpack.c.b16 %v1191, %v1187
    %v1552 = vpack.c.b16 %v1192, %v1188
    %v1553 = vpack.c.b16 %v1197, %v1193
    %v1554 = vpack.c.b16 %v1198, %v1194
    %v1555 = vpack.c.b16 %v1199, %v1195
    %v1556 = vpack.c.b16 %v1200, %v1196
    %v1557 = vpack.c.b16 %v1205, %v1201
    %v1558 = vpack.c.b16 %v1206, %v1202
    %v1559 = vpack.c.b16 %v1207, %v1203
    %v1560 = vpack.c.b16 %v1208, %v1204
    %v1561 = vpack.c.b16 %v1213, %v1209
    %v1562 = vpack.c.b16 %v1214, %v1210
    %v1563 = vpack.c.b16 %v1215, %v1211
    %v1564 = vpack.c.b16 %v1216, %v1212
    %v1565 = vpack.c.b16 %v1221, %v1217
    %v1566 = vpack.c.b16 %v1222, %v1218
    %v1567 = vpack.c.b16 %v1223, %v1219
    %v1568 = vpack.c.b16 %v1224, %v1220
    %v1569 = vpack.c.b16 %v1229, %v1225
    %v1570 = vpack.c.b16 %v1230, %v1226
    %v1571 = vpack.c.b16 %v1231, %v1227
    %v1572 = vpack.c.b16 %v1232, %v1228
    %v1573 = vpack.c.b16 %v1237, %v1233
    %v1574 = vpack.c.b16 %v1238, %v1234
    %v1575 = vpack.c.b16 %v1239, %v1235
    %v1576 = vpack.c.b16 %v1240, %v1236
    %v1577 = vpack.c.b16 %v1245, %v1241
    %v1578 = vpack.c.b16 %v1246, %v1242
    %v1579 = vpack.c.b16 %v1247, %v1243
    %v1580 = vpack.c.b16 %v1248, %v1244
    %v1581 = vpack.c.b16 %v1253, %v1249
    %v1582 = vpack.c.b16 %v1254, %v1250
    %v1583 = vpack.c.b16 %v1255, %v1251
    %v1584 = vpack.c.b16 %v1256, %v1252
    %v1585 = vpack.c.b16 %v1261, %v1257
    %v1586 = vpack.c.b16 %v1262, %v1258
    %v1587 = vpack.c.b16 %v1263, %v1259
    %v1588 = vpack.c.b16 %v1264, %v1260
    %v1589 = vpack.c.b16 %v1269, %v1265
    %v1590 = vpack.c.b16 %v1270, %v1266
    %v1591 = vpack.c.b16 %v1271, %v1267
    %v1592 = vpack.c.b16 %v1272, %v1268
    %v1593 = vpack.c.b16 %v1277, %v1273
    %v1594 = vpack.c.b16 %v1278, %v1274
    %v1595 = vpack.c.b16 %v1279, %v1275
    %v1596 = vpack.c.b16 %v1280, %v1276
    %v1597 = vpack.c.b16 %v1285, %v1281
    %v1598 = vpack.c.b16 %v1286, %v1282
    %v1599 = vpack.c.b16 %v1287, %v1283
    %v1600 = vpack.c.b16 %v1288, %v1284
    %v1601 = vpack.c.b16 %v1293, %v1289
    %v1602 = vpack.c.b16 %v1294, %v1290
    %v1603 = vpack.c.b16 %v1295, %v1291
    %v1604 = vpack.c.b16 %v1296, %v1292
    %v1605 = vpack.c.b16 %v1301, %v1297
    %v1606 = vpack.c.b16 %v1302, %v1298
    %v1607 = vpack.c.b16 %v1303, %v1299
    %v1608 = vpack.c.b16 %v1304, %v1300
    %v1609 = vpack.c.b16 %v1309, %v1305
    %v1610 = vpack.c.b16 %v1310, %v1306
    %v1611 = vpack.c.b16 %v1311, %v1307
    %v1612 = vpack.c.b16 %v1312, %v1308
    %v1613 = vpack.c.b16 %v1317, %v1313
    %v1614 = vpack.c.b16 %v1318, %v1314
    %v1615 = vpack.c.b16 %v1319, %v1315
    %v1616 = vpack.c.b16 %v1320, %v1316
    %v1617 = vpack.c.b16 %v1325, %v1321
    %v1618 = vpack.c.b16 %v1326, %v1322
    %v1619 = vpack.c.b16 %v1327, %v1323
    %v1620 = vpack.c.b16 %v1328, %v1324
    %v1621 = vpack.c.b16 %v1333, %v1329
    %v1622 = vpack.c.b16 %v1334, %v1330
    %v1623 = vpack.c.b16 %v1335, %v1331
    %v1624 = vpack.c.b16 %v1336, %v1332
    %v1625 = vpack.c.b16 %v1341, %v1337
    %v1626 = vpack.c.b16 %v1342, %v1338
    %v1627 = vpack.c.b16 %v1343, %v1339
    %v1628 = vpack.c.b16 %v1344, %v1340
    %v1629 = vpack.c.b16 %v1349, %v1345
    %v1630 = vpack.c.b16 %v1350, %v1346
    %v1631 = vpack.c.b16 %v1351, %v1347
    %v1632 = vpack.c.b16 %v1352, %v1348
    %v1633 = vpack.c.b16 %v1357, %v1353
    %v1634 = vpack.c.b16 %v1358, %v1354
    %v1635 = vpack.c.b16 %v1359, %v1355
    %v1636 = vpack.c.b16 %v1360, %v1356
    %v1637 = vpack.c.b16 %v1365, %v1361
    %v1638 = vpack.c.b16 %v1366, %v1362
    %v1639 = vpack.c.b16 %v1367, %v1363
    %v1640 = vpack.c.b16 %v1368, %v1364
    %v1641 = vpack.c.b16 %v1373, %v1369
    %v1642 = vpack.c.b16 %v1374, %v1370
    %v1643 = vpack.c.b16 %v1375, %v1371
    %v1644 = vpack.c.b16 %v1376, %v1372
    %v1645 = vpack.c.b16 %v1381, %v1377
    %v1646 = vpack.c.b16 %v1382, %v1378
    %v1647 = vpack.c.b16 %v1383, %v1379
    %v1648 = vpack.c.b16 %v1384, %v1380
    %v1649 = vpack.c.b16 %v1389, %v1385
    %v1650 = vpack.c.b16 %v1390, %v1386
    %v1651 = vpack.c.b16 %v1391, %v1387
    %v1652 = vpack.c.b16 %v1392, %v1388
    %v1653 = vpack.c.b16 %v1397, %v1393
    %v1654 = vpack.c.b16 %v1398, %v1394
    %v1655 = vpack.c.b16 %v1399, %v1395
    %v1656 = vpack.c.b16 %v1400, %v1396
    %v1657 = vpack.c.b16 %v1405, %v1401
    %v1658 = vpack.c.b16 %v1406, %v1402
    %v1659 = vpack.c.b16 %v1407, %v1403
    %v1660 = vpack.c.b16 %v1408, %v1404
    %v1661 = vpack.c.b16 %v1409, %v1409
    %v1662 = vpack.c.b16 %v1410, %v1410
    %v1663 = vpack.c.b16 %v1411, %v1411
    %v1664 = vpack.c.b16 %v1412, %v1412
    %vm1913 = vcmask 850944
    %v1915 = vsel %vm1913, %v402, 0
    %vm1917 = vcmask 1043456
    %v1919 = vsel %vm1917, %v1661, 0
    %v1922 = vsel %vm1917, %v1662, 0
    %v1925 = vsel %vm1917, %v1663, 0
    %v1928 = vsel %vm1917, %v1664, 0
    %1930 = vmatpush.bf16.msra.mxu0 %v1441
    %1931 = vmatpush.bf16.msra.mxu0 %v1437
    %1932 = vmatpush.bf16.msra.mxu0 %v1433
    %1933 = vmatpush.bf16.msra.mxu0 %v1429
    %1934 = vmatpush.bf16.msra.mxu0 %v1425
    %1935 = vmatpush.bf16.msra.mxu0 %v1421
    %1936 = vmatpush.bf16.msra.mxu0 %v1417
    %1937 = vmatpush.bf16.msra.mxu0 %v1413
    %1938 = vmatmul.bf16.gmra.mxu0 %v395
    %v1939 = vpop.f32.mrf.mxu0
    %v1940 = vadd.f32 %v655, %v1939
    %v1941 = vpop.f32.mrf.mxu0
    %1942 = vdwg.mxu0
    %1943 = vmatpush.bf16.msra.mxu0 %v1473
    %1944 = vmatpush.bf16.msra.mxu0 %v1469
    %1945 = vmatpush.bf16.msra.mxu0 %v1465
    %1946 = vmatpush.bf16.msra.mxu0 %v1461
    %1947 = vmatpush.bf16.msra.mxu0 %v1457
    %1948 = vmatpush.bf16.msra.mxu0 %v1453
    %1949 = vmatpush.bf16.msra.mxu0 %v1449
    %1950 = vmatpush.bf16.msra.mxu0 %v1445
    %1951 = vmatmul.bf16.gmra.mxu0 %v396
    %v1952 = vpop.f32.mrf.mxu0
    %v1953 = vadd.f32 %v1940, %v1952
    %v1954 = vpop.f32.mrf.mxu0
    %1955 = vdwg.mxu0
    %1956 = vmatpush.bf16.msra.mxu0 %v1505
    %1957 = vmatpush.bf16.msra.mxu0 %v1501
    %1958 = vmatpush.bf16.msra.mxu0 %v1497
    %1959 = vmatpush.bf16.msra.mxu0 %v1493
    %1960 = vmatpush.bf16.msra.mxu0 %v1489
    %1961 = vmatpush.bf16.msra.mxu0 %v1485
    %1962 = vmatpush.bf16.msra.mxu0 %v1481
    %1963 = vmatpush.bf16.msra.mxu0 %v1477
    %1964 = vmatmul.bf16.gmra.mxu0 %v397
    %v1965 = vpop.f32.mrf.mxu0
    %v1966 = vadd.f32 %v1953, %v1965
    %v1967 = vpop.f32.mrf.mxu0
    %1968 = vdwg.mxu0
    %1969 = vmatpush.bf16.msra.mxu0 %v1537
    %1970 = vmatpush.bf16.msra.mxu0 %v1533
    %1971 = vmatpush.bf16.msra.mxu0 %v1529
    %1972 = vmatpush.bf16.msra.mxu0 %v1525
    %1973 = vmatpush.bf16.msra.mxu0 %v1521
    %1974 = vmatpush.bf16.msra.mxu0 %v1517
    %1975 = vmatpush.bf16.msra.mxu0 %v1513
    %1976 = vmatpush.bf16.msra.mxu0 %v1509
    %1977 = vmatmul.bf16.gmra.mxu0 %v398
    %v1978 = vpop.f32.mrf.mxu0
    %v1979 = vadd.f32 %v1966, %v1978
    %v1980 = vpop.f32.mrf.mxu0
    %1981 = vdwg.mxu0
    %1982 = vmatpush.bf16.msra.mxu0 %v1569
    %1983 = vmatpush.bf16.msra.mxu0 %v1565
    %1984 = vmatpush.bf16.msra.mxu0 %v1561
    %1985 = vmatpush.bf16.msra.mxu0 %v1557
    %1986 = vmatpush.bf16.msra.mxu0 %v1553
    %1987 = vmatpush.bf16.msra.mxu0 %v1549
    %1988 = vmatpush.bf16.msra.mxu0 %v1545
    %1989 = vmatpush.bf16.msra.mxu0 %v1541
    %1990 = vmatmul.bf16.gmra.mxu0 %v399
    %v1991 = vpop.f32.mrf.mxu0
    %v1992 = vadd.f32 %v1979, %v1991
    %v1993 = vpop.f32.mrf.mxu0
    %1994 = vdwg.mxu0
    %1995 = vmatpush.bf16.msra.mxu0 %v1601
    %1996 = vmatpush.bf16.msra.mxu0 %v1597
    %1997 = vmatpush.bf16.msra.mxu0 %v1593
    %1998 = vmatpush.bf16.msra.mxu0 %v1589
    %1999 = vmatpush.bf16.msra.mxu0 %v1585
    %2000 = vmatpush.bf16.msra.mxu0 %v1581
    %2001 = vmatpush.bf16.msra.mxu0 %v1577
    %2002 = vmatpush.bf16.msra.mxu0 %v1573
    %2003 = vmatmul.bf16.gmra.mxu0 %v400
    %v2004 = vpop.f32.mrf.mxu0
    %v2005 = vadd.f32 %v1992, %v2004
    %v2006 = vpop.f32.mrf.mxu0
    %2007 = vdwg.mxu0
    %2008 = vmatpush.bf16.msra.mxu0 %v1633
    %2009 = vmatpush.bf16.msra.mxu0 %v1629
    %2010 = vmatpush.bf16.msra.mxu0 %v1625
    %2011 = vmatpush.bf16.msra.mxu0 %v1621
    %2012 = vmatpush.bf16.msra.mxu0 %v1617
    %2013 = vmatpush.bf16.msra.mxu0 %v1613
    %2014 = vmatpush.bf16.msra.mxu0 %v1609
    %2015 = vmatpush.bf16.msra.mxu0 %v1605
    %2016 = vmatmul.bf16.gmra.mxu0 %v401
    %v2017 = vpop.f32.mrf.mxu0
    %v2018 = vadd.f32 %v2005, %v2017
    %v2019 = vpop.f32.mrf.mxu0
    %2020 = vdwg.mxu0
    %2021 = vmatpush.bf16.msra.mxu0 0
    %2022 = vmatpush.bf16.msra.mxu0 %v1919
    %2023 = vmatpush.bf16.msra.mxu0 %v1657
    %2024 = vmatpush.bf16.msra.mxu0 %v1653
    %2025 = vmatpush.bf16.msra.mxu0 %v1649
    %2026 = vmatpush.bf16.msra.mxu0 %v1645
    %2027 = vmatpush.bf16.msra.mxu0 %v1641
    %2028 = vmatpush.bf16.msra.mxu0 %v1637
    %2029 = vmatmul.bf16.gmra.mxu0 %v1915
    %v2030 = vpop.f32.mrf.mxu0
    %v2031 = vadd.f32 %v2018, %v2030
    %v2032 = vpop.f32.mrf.mxu0
    %2033 = vdwg.mxu0
    %2034 = vmatpush.bf16.msra.mxu0 %v1442
    %2035 = vmatpush.bf16.msra.mxu0 %v1438
    %2036 = vmatpush.bf16.msra.mxu0 %v1434
    %2037 = vmatpush.bf16.msra.mxu0 %v1430
    %2038 = vmatpush.bf16.msra.mxu0 %v1426
    %2039 = vmatpush.bf16.msra.mxu0 %v1422
    %2040 = vmatpush.bf16.msra.mxu0 %v1418
    %2041 = vmatpush.bf16.msra.mxu0 %v1414
    %2042 = vmatmul.bf16.gmra.mxu0 %v395
    %v2043 = vpop.f32.mrf.mxu0
    %v2044 = vadd.f32 %v656, %v2043
    %v2045 = vpop.f32.mrf.mxu0
    %2046 = vdwg.mxu0
    %2047 = vmatpush.bf16.msra.mxu0 %v1474
    %2048 = vmatpush.bf16.msra.mxu0 %v1470
    %2049 = vmatpush.bf16.msra.mxu0 %v1466
    %2050 = vmatpush.bf16.msra.mxu0 %v1462
    %2051 = vmatpush.bf16.msra.mxu0 %v1458
    %2052 = vmatpush.bf16.msra.mxu0 %v1454
    %2053 = vmatpush.bf16.msra.mxu0 %v1450
    %2054 = vmatpush.bf16.msra.mxu0 %v1446
    %2055 = vmatmul.bf16.gmra.mxu0 %v396
    %v2056 = vpop.f32.mrf.mxu0
    %v2057 = vadd.f32 %v2044, %v2056
    %v2058 = vpop.f32.mrf.mxu0
    %2059 = vdwg.mxu0
    %2060 = vmatpush.bf16.msra.mxu0 %v1506
    %2061 = vmatpush.bf16.msra.mxu0 %v1502
    %2062 = vmatpush.bf16.msra.mxu0 %v1498
    %2063 = vmatpush.bf16.msra.mxu0 %v1494
    %2064 = vmatpush.bf16.msra.mxu0 %v1490
    %2065 = vmatpush.bf16.msra.mxu0 %v1486
    %2066 = vmatpush.bf16.msra.mxu0 %v1482
    %2067 = vmatpush.bf16.msra.mxu0 %v1478
    %2068 = vmatmul.bf16.gmra.mxu0 %v397
    %v2069 = vpop.f32.mrf.mxu0
    %v2070 = vadd.f32 %v2057, %v2069
    %v2071 = vpop.f32.mrf.mxu0
    %2072 = vdwg.mxu0
    %2073 = vmatpush.bf16.msra.mxu0 %v1538
    %2074 = vmatpush.bf16.msra.mxu0 %v1534
    %2075 = vmatpush.bf16.msra.mxu0 %v1530
    %2076 = vmatpush.bf16.msra.mxu0 %v1526
    %2077 = vmatpush.bf16.msra.mxu0 %v1522
    %2078 = vmatpush.bf16.msra.mxu0 %v1518
    %2079 = vmatpush.bf16.msra.mxu0 %v1514
    %2080 = vmatpush.bf16.msra.mxu0 %v1510
    %2081 = vmatmul.bf16.gmra.mxu0 %v398
    %v2082 = vpop.f32.mrf.mxu0
    %v2083 = vadd.f32 %v2070, %v2082
    %v2084 = vpop.f32.mrf.mxu0
    %2085 = vdwg.mxu0
    %2086 = vmatpush.bf16.msra.mxu0 %v1570
    %2087 = vmatpush.bf16.msra.mxu0 %v1566
    %2088 = vmatpush.bf16.msra.mxu0 %v1562
    %2089 = vmatpush.bf16.msra.mxu0 %v1558
    %2090 = vmatpush.bf16.msra.mxu0 %v1554
    %2091 = vmatpush.bf16.msra.mxu0 %v1550
    %2092 = vmatpush.bf16.msra.mxu0 %v1546
    %2093 = vmatpush.bf16.msra.mxu0 %v1542
    %2094 = vmatmul.bf16.gmra.mxu0 %v399
    %v2095 = vpop.f32.mrf.mxu0
    %v2096 = vadd.f32 %v2083, %v2095
    %v2097 = vpop.f32.mrf.mxu0
    %2098 = vdwg.mxu0
    %2099 = vmatpush.bf16.msra.mxu0 %v1602
    %2100 = vmatpush.bf16.msra.mxu0 %v1598
    %2101 = vmatpush.bf16.msra.mxu0 %v1594
    %2102 = vmatpush.bf16.msra.mxu0 %v1590
    %2103 = vmatpush.bf16.msra.mxu0 %v1586
    %2104 = vmatpush.bf16.msra.mxu0 %v1582
    %2105 = vmatpush.bf16.msra.mxu0 %v1578
    %2106 = vmatpush.bf16.msra.mxu0 %v1574
    %2107 = vmatmul.bf16.gmra.mxu0 %v400
    %v2108 = vpop.f32.mrf.mxu0
    %v2109 = vadd.f32 %v2096, %v2108
    %v2110 = vpop.f32.mrf.mxu0
    %2111 = vdwg.mxu0
    %2112 = vmatpush.bf16.msra.mxu0 %v1634
    %2113 = vmatpush.bf16.msra.mxu0 %v1630
    %2114 = vmatpush.bf16.msra.mxu0 %v1626
    %2115 = vmatpush.bf16.msra.mxu0 %v1622
    %2116 = vmatpush.bf16.msra.mxu0 %v1618
    %2117 = vmatpush.bf16.msra.mxu0 %v1614
    %2118 = vmatpush.bf16.msra.mxu0 %v1610
    %2119 = vmatpush.bf16.msra.mxu0 %v1606
    %2120 = vmatmul.bf16.gmra.mxu0 %v401
    %v2121 = vpop.f32.mrf.mxu0
    %v2122 = vadd.f32 %v2109, %v2121
    %v2123 = vpop.f32.mrf.mxu0
    %2124 = vdwg.mxu0
    %2125 = vmatpush.bf16.msra.mxu0 0
    %2126 = vmatpush.bf16.msra.mxu0 %v1922
    %2127 = vmatpush.bf16.msra.mxu0 %v1658
    %2128 = vmatpush.bf16.msra.mxu0 %v1654
    %2129 = vmatpush.bf16.msra.mxu0 %v1650
    %2130 = vmatpush.bf16.msra.mxu0 %v1646
    %2131 = vmatpush.bf16.msra.mxu0 %v1642
    %2132 = vmatpush.bf16.msra.mxu0 %v1638
    %2133 = vmatmul.bf16.gmra.mxu0 %v1915
    %v2134 = vpop.f32.mrf.mxu0
    %v2135 = vadd.f32 %v2122, %v2134
    %v2136 = vpop.f32.mrf.mxu0
    %2137 = vdwg.mxu0
    %2138 = vmatpush.bf16.msra.mxu0 %v1443
    %2139 = vmatpush.bf16.msra.mxu0 %v1439
    %2140 = vmatpush.bf16.msra.mxu0 %v1435
    %2141 = vmatpush.bf16.msra.mxu0 %v1431
    %2142 = vmatpush.bf16.msra.mxu0 %v1427
    %2143 = vmatpush.bf16.msra.mxu0 %v1423
    %2144 = vmatpush.bf16.msra.mxu0 %v1419
    %2145 = vmatpush.bf16.msra.mxu0 %v1415
    %2146 = vmatmul.bf16.gmra.mxu0 %v395
    %v2147 = vpop.f32.mrf.mxu0
    %v2148 = vadd.f32 %v657, %v2147
    %v2149 = vpop.f32.mrf.mxu0
    %2150 = vdwg.mxu0
    %2151 = vmatpush.bf16.msra.mxu0 %v1475
    %2152 = vmatpush.bf16.msra.mxu0 %v1471
    %2153 = vmatpush.bf16.msra.mxu0 %v1467
    %2154 = vmatpush.bf16.msra.mxu0 %v1463
    %2155 = vmatpush.bf16.msra.mxu0 %v1459
    %2156 = vmatpush.bf16.msra.mxu0 %v1455
    %2157 = vmatpush.bf16.msra.mxu0 %v1451
    %2158 = vmatpush.bf16.msra.mxu0 %v1447
    %2159 = vmatmul.bf16.gmra.mxu0 %v396
    %v2160 = vpop.f32.mrf.mxu0
    %v2161 = vadd.f32 %v2148, %v2160
    %v2162 = vpop.f32.mrf.mxu0
    %2163 = vdwg.mxu0
    %2164 = vmatpush.bf16.msra.mxu0 %v1507
    %2165 = vmatpush.bf16.msra.mxu0 %v1503
    %2166 = vmatpush.bf16.msra.mxu0 %v1499
    %2167 = vmatpush.bf16.msra.mxu0 %v1495
    %2168 = vmatpush.bf16.msra.mxu0 %v1491
    %2169 = vmatpush.bf16.msra.mxu0 %v1487
    %2170 = vmatpush.bf16.msra.mxu0 %v1483
    %2171 = vmatpush.bf16.msra.mxu0 %v1479
    %2172 = vmatmul.bf16.gmra.mxu0 %v397
    %v2173 = vpop.f32.mrf.mxu0
    %v2174 = vadd.f32 %v2161, %v2173
    %v2175 = vpop.f32.mrf.mxu0
    %2176 = vdwg.mxu0
    %2177 = vmatpush.bf16.msra.mxu0 %v1539
    %2178 = vmatpush.bf16.msra.mxu0 %v1535
    %2179 = vmatpush.bf16.msra.mxu0 %v1531
    %2180 = vmatpush.bf16.msra.mxu0 %v1527
    %2181 = vmatpush.bf16.msra.mxu0 %v1523
    %2182 = vmatpush.bf16.msra.mxu0 %v1519
    %2183 = vmatpush.bf16.msra.mxu0 %v1515
    %2184 = vmatpush.bf16.msra.mxu0 %v1511
    %2185 = vmatmul.bf16.gmra.mxu0 %v398
    %v2186 = vpop.f32.mrf.mxu0
    %v2187 = vadd.f32 %v2174, %v2186
    %v2188 = vpop.f32.mrf.mxu0
    %2189 = vdwg.mxu0
    %2190 = vmatpush.bf16.msra.mxu0 %v1571
    %2191 = vmatpush.bf16.msra.mxu0 %v1567
    %2192 = vmatpush.bf16.msra.mxu0 %v1563
    %2193 = vmatpush.bf16.msra.mxu0 %v1559
    %2194 = vmatpush.bf16.msra.mxu0 %v1555
    %2195 = vmatpush.bf16.msra.mxu0 %v1551
    %2196 = vmatpush.bf16.msra.mxu0 %v1547
    %2197 = vmatpush.bf16.msra.mxu0 %v1543
    %2198 = vmatmul.bf16.gmra.mxu0 %v399
    %v2199 = vpop.f32.mrf.mxu0
    %v2200 = vadd.f32 %v2187, %v2199
    %v2201 = vpop.f32.mrf.mxu0
    %2202 = vdwg.mxu0
    %2203 = vmatpush.bf16.msra.mxu0 %v1603
    %2204 = vmatpush.bf16.msra.mxu0 %v1599
    %2205 = vmatpush.bf16.msra.mxu0 %v1595
    %2206 = vmatpush.bf16.msra.mxu0 %v1591
    %2207 = vmatpush.bf16.msra.mxu0 %v1587
    %2208 = vmatpush.bf16.msra.mxu0 %v1583
    %2209 = vmatpush.bf16.msra.mxu0 %v1579
    %2210 = vmatpush.bf16.msra.mxu0 %v1575
    %2211 = vmatmul.bf16.gmra.mxu0 %v400
    %v2212 = vpop.f32.mrf.mxu0
    %v2213 = vadd.f32 %v2200, %v2212
    %v2214 = vpop.f32.mrf.mxu0
    %2215 = vdwg.mxu0
    %2216 = vmatpush.bf16.msra.mxu0 %v1635
    %2217 = vmatpush.bf16.msra.mxu0 %v1631
    %2218 = vmatpush.bf16.msra.mxu0 %v1627
    %2219 = vmatpush.bf16.msra.mxu0 %v1623
    %2220 = vmatpush.bf16.msra.mxu0 %v1619
    %2221 = vmatpush.bf16.msra.mxu0 %v1615
    %2222 = vmatpush.bf16.msra.mxu0 %v1611
    %2223 = vmatpush.bf16.msra.mxu0 %v1607
    %2224 = vmatmul.bf16.gmra.mxu0 %v401
    %v2225 = vpop.f32.mrf.mxu0
    %v2226 = vadd.f32 %v2213, %v2225
    %v2227 = vpop.f32.mrf.mxu0
    %2228 = vdwg.mxu0
    %2229 = vmatpush.bf16.msra.mxu0 0
    %2230 = vmatpush.bf16.msra.mxu0 %v1925
    %2231 = vmatpush.bf16.msra.mxu0 %v1659
    %2232 = vmatpush.bf16.msra.mxu0 %v1655
    %2233 = vmatpush.bf16.msra.mxu0 %v1651
    %2234 = vmatpush.bf16.msra.mxu0 %v1647
    %2235 = vmatpush.bf16.msra.mxu0 %v1643
    %2236 = vmatpush.bf16.msra.mxu0 %v1639
    %2237 = vmatmul.bf16.gmra.mxu0 %v1915
    %v2238 = vpop.f32.mrf.mxu0
    %v2239 = vadd.f32 %v2226, %v2238
    %v2240 = vpop.f32.mrf.mxu0
    %2241 = vdwg.mxu0
    %2242 = vmatpush.bf16.msra.mxu0 %v1444
    %2243 = vmatpush.bf16.msra.mxu0 %v1440
    %2244 = vmatpush.bf16.msra.mxu0 %v1436
    %2245 = vmatpush.bf16.msra.mxu0 %v1432
    %2246 = vmatpush.bf16.msra.mxu0 %v1428
    %2247 = vmatpush.bf16.msra.mxu0 %v1424
    %2248 = vmatpush.bf16.msra.mxu0 %v1420
    %2249 = vmatpush.bf16.msra.mxu0 %v1416
    %2250 = vmatmul.bf16.gmra.mxu0 %v395
    %v2251 = vpop.f32.mrf.mxu0
    %v2252 = vadd.f32 %v658, %v2251
    %v2253 = vpop.f32.mrf.mxu0
    %2254 = vdwg.mxu0
    %2255 = vmatpush.bf16.msra.mxu0 %v1476
    %2256 = vmatpush.bf16.msra.mxu0 %v1472
    %2257 = vmatpush.bf16.msra.mxu0 %v1468
    %2258 = vmatpush.bf16.msra.mxu0 %v1464
    %2259 = vmatpush.bf16.msra.mxu0 %v1460
    %2260 = vmatpush.bf16.msra.mxu0 %v1456
    %2261 = vmatpush.bf16.msra.mxu0 %v1452
    %2262 = vmatpush.bf16.msra.mxu0 %v1448
    %2263 = vmatmul.bf16.gmra.mxu0 %v396
    %v2264 = vpop.f32.mrf.mxu0
    %v2265 = vadd.f32 %v2252, %v2264
    %v2266 = vpop.f32.mrf.mxu0
    %2267 = vdwg.mxu0
    %2268 = vmatpush.bf16.msra.mxu0 %v1508
    %2269 = vmatpush.bf16.msra.mxu0 %v1504
    %2270 = vmatpush.bf16.msra.mxu0 %v1500
    %2271 = vmatpush.bf16.msra.mxu0 %v1496
    %2272 = vmatpush.bf16.msra.mxu0 %v1492
    %2273 = vmatpush.bf16.msra.mxu0 %v1488
    %2274 = vmatpush.bf16.msra.mxu0 %v1484
    %2275 = vmatpush.bf16.msra.mxu0 %v1480
    %2276 = vmatmul.bf16.gmra.mxu0 %v397
    %v2277 = vpop.f32.mrf.mxu0
    %v2278 = vadd.f32 %v2265, %v2277
    %v2279 = vpop.f32.mrf.mxu0
    %2280 = vdwg.mxu0
    %2281 = vmatpush.bf16.msra.mxu0 %v1540
    %2282 = vmatpush.bf16.msra.mxu0 %v1536
    %2283 = vmatpush.bf16.msra.mxu0 %v1532
    %2284 = vmatpush.bf16.msra.mxu0 %v1528
    %2285 = vmatpush.bf16.msra.mxu0 %v1524
    %2286 = vmatpush.bf16.msra.mxu0 %v1520
    %2287 = vmatpush.bf16.msra.mxu0 %v1516
    %2288 = vmatpush.bf16.msra.mxu0 %v1512
    %2289 = vmatmul.bf16.gmra.mxu0 %v398
    %v2290 = vpop.f32.mrf.mxu0
    %v2291 = vadd.f32 %v2278, %v2290
    %v2292 = vpop.f32.mrf.mxu0
    %2293 = vdwg.mxu0
    %2294 = vmatpush.bf16.msra.mxu0 %v1572
    %2295 = vmatpush.bf16.msra.mxu0 %v1568
    %2296 = vmatpush.bf16.msra.mxu0 %v1564
    %2297 = vmatpush.bf16.msra.mxu0 %v1560
    %2298 = vmatpush.bf16.msra.mxu0 %v1556
    %2299 = vmatpush.bf16.msra.mxu0 %v1552
    %2300 = vmatpush.bf16.msra.mxu0 %v1548
    %2301 = vmatpush.bf16.msra.mxu0 %v1544
    %2302 = vmatmul.bf16.gmra.mxu0 %v399
    %v2303 = vpop.f32.mrf.mxu0
    %v2304 = vadd.f32 %v2291, %v2303
    %v2305 = vpop.f32.mrf.mxu0
    %2306 = vdwg.mxu0
    %2307 = vmatpush.bf16.msra.mxu0 %v1604
    %2308 = vmatpush.bf16.msra.mxu0 %v1600
    %2309 = vmatpush.bf16.msra.mxu0 %v1596
    %2310 = vmatpush.bf16.msra.mxu0 %v1592
    %2311 = vmatpush.bf16.msra.mxu0 %v1588
    %2312 = vmatpush.bf16.msra.mxu0 %v1584
    %2313 = vmatpush.bf16.msra.mxu0 %v1580
    %2314 = vmatpush.bf16.msra.mxu0 %v1576
    %2315 = vmatmul.bf16.gmra.mxu0 %v400
    %v2316 = vpop.f32.mrf.mxu0
    %v2317 = vadd.f32 %v2304, %v2316
    %v2318 = vpop.f32.mrf.mxu0
    %2319 = vdwg.mxu0
    %2320 = vmatpush.bf16.msra.mxu0 %v1636
    %2321 = vmatpush.bf16.msra.mxu0 %v1632
    %2322 = vmatpush.bf16.msra.mxu0 %v1628
    %2323 = vmatpush.bf16.msra.mxu0 %v1624
    %2324 = vmatpush.bf16.msra.mxu0 %v1620
    %2325 = vmatpush.bf16.msra.mxu0 %v1616
    %2326 = vmatpush.bf16.msra.mxu0 %v1612
    %2327 = vmatpush.bf16.msra.mxu0 %v1608
    %2328 = vmatmul.bf16.gmra.mxu0 %v401
    %v2329 = vpop.f32.mrf.mxu0
    %v2330 = vadd.f32 %v2317, %v2329
    %v2331 = vpop.f32.mrf.mxu0
    %2332 = vdwg.mxu0
    %2333 = vmatpush.bf16.msra.mxu0 0
    %2334 = vmatpush.bf16.msra.mxu0 %v1928
    %2335 = vmatpush.bf16.msra.mxu0 %v1660
    %2336 = vmatpush.bf16.msra.mxu0 %v1656
    %2337 = vmatpush.bf16.msra.mxu0 %v1652
    %2338 = vmatpush.bf16.msra.mxu0 %v1648
    %2339 = vmatpush.bf16.msra.mxu0 %v1644
    %2340 = vmatpush.bf16.msra.mxu0 %v1640
    %2341 = vmatmul.bf16.gmra.mxu0 %v1915
    %v2342 = vpop.f32.mrf.mxu0
    %v2343 = vadd.f32 %v2330, %v2342
    %v2344 = vpop.f32.mrf.mxu0
    %2345 = vdwg.mxu0
    %v2346 = vmax.f32 %v2031, 0.0
    %v2347 = vmax.f32 %v2135, 0.0
    %v2348 = vmax.f32 %v2239, 0.0
    %v2349 = vmax.f32 %v2343, 0.0
    %v2350 = vpack.c.bf16 %v2346, %v2346
    %v2351 = vpack.c.bf16 %v2347, %v2347
    %v2352 = vpack.c.bf16 %v2348, %v2348
    %v2353 = vpack.c.bf16 %v2349, %v2349
    %v2354 = vld [vmem:[#allocation8] sm:$0xff]
    %v2355 = vld [vmem:[#allocation8 + $0x8] sm:$0xff]
    %v2356 = vld [vmem:[#allocation8 + $0x10] sm:$0xff]
    %v2357 = vld [vmem:[#allocation8 + $0x18] sm:$0xff]
    %v2358 = vld [vmem:[#allocation8 + $0x20] sm:$0xff]
    %v2359 = vld [vmem:[#allocation8 + $0x28] sm:$0xff]
    %v2360 = vld [vmem:[#allocation8 + $0x30] sm:$0xff]
    %v2361 = vld [vmem:[#allocation8 + $0x38] sm:$0xff]
    %v2362 = vld [vmem:[#allocation8 + $0x40] sm:$0xff]
    %v2363 = vld [vmem:[#allocation8 + $0x48] sm:$0xff]
    %v2364 = vld [vmem:[#allocation8 + $0x50] sm:$0xff]
    %v2365 = vld [vmem:[#allocation8 + $0x58] sm:$0xff]
    %v2366 = vld [vmem:[#allocation8 + $0x60] sm:$0xff]
    %v2367 = vld [vmem:[#allocation8 + $0x68] sm:$0xff]
    %v2368 = vld [vmem:[#allocation8 + $0x70] sm:$0xff]
    %v2369 = vld [vmem:[#allocation8 + $0x78] sm:$0xff]
    %v2370 = vld [vmem:[#allocation8 + $0x80] sm:$0xff]
    %v2371 = vld [vmem:[#allocation8 + $0x88] sm:$0xff]
    %v2372 = vld [vmem:[#allocation8 + $0x90] sm:$0xff]
    %v2373 = vld [vmem:[#allocation8 + $0x98] sm:$0xff]
    %v2374 = vld [vmem:[#allocation8 + $0xa0] sm:$0xff]
    %v2375 = vld [vmem:[#allocation8 + $0xa8] sm:$0xff]
    %v2376 = vld [vmem:[#allocation8 + $0xb0] sm:$0xff]
    %v2377 = vld [vmem:[#allocation8 + $0xb8] sm:$0xff]
    %v2378 = vld [vmem:[#allocation8 + $0xc0] sm:$0xff]
    %v2379 = vld [vmem:[#allocation8 + $0xc8] sm:$0xff]
    %v2380 = vld [vmem:[#allocation8 + $0xd0] sm:$0xff]
    %v2381 = vld [vmem:[#allocation8 + $0xd8] sm:$0xff]
    %v2382 = vld [vmem:[#allocation8 + $0xe0] sm:$0xff]
    %v2383 = vld [vmem:[#allocation8 + $0xe8] sm:$0xff]
    %v2384 = vld [vmem:[#allocation8 + $0xf0] sm:$0xff]
    %v2385 = vld [vmem:[#allocation8 + $0xf8] sm:$0xff]
    %v2386 = vld [vmem:[#allocation8 + $0x100] sm:$0xff]
    %v2387 = vld [vmem:[#allocation8 + $0x108] sm:$0xff]
    %v2388 = vld [vmem:[#allocation8 + $0x110] sm:$0xff]
    %v2389 = vld [vmem:[#allocation8 + $0x118] sm:$0xff]
    %v2390 = vld [vmem:[#allocation8 + $0x120] sm:$0xff]
    %v2391 = vld [vmem:[#allocation8 + $0x128] sm:$0xff]
    %v2392 = vld [vmem:[#allocation8 + $0x130] sm:$0xff]
    %v2393 = vld [vmem:[#allocation8 + $0x138] sm:$0xff]
    %v2394 = vld [vmem:[#allocation8 + $0x140] sm:$0xff]
    %v2395 = vld [vmem:[#allocation8 + $0x148] sm:$0xff]
    %v2396 = vld [vmem:[#allocation8 + $0x150] sm:$0xff]
    %v2397 = vld [vmem:[#allocation8 + $0x158] sm:$0xff]
    %v2398 = vld [vmem:[#allocation8 + $0x160] sm:$0xff]
    %v2399 = vld [vmem:[#allocation8 + $0x168] sm:$0xff]
    %v2400 = vld [vmem:[#allocation8 + $0x170] sm:$0xff]
    %v2401 = vld [vmem:[#allocation8 + $0x178] sm:$0xff]
    %v2402 = vld [vmem:[#allocation8 + $0x180] sm:$0xff]
    %v2403 = vld [vmem:[#allocation8 + $0x188] sm:$0xff]
    %v2404 = vld [vmem:[#allocation8 + $0x190] sm:$0xff]
    %v2405 = vld [vmem:[#allocation8 + $0x198] sm:$0xff]
    %v2406 = vld [vmem:[#allocation8 + $0x1a0] sm:$0xff]
    %v2407 = vld [vmem:[#allocation8 + $0x1a8] sm:$0xff]
    %v2408 = vld [vmem:[#allocation8 + $0x1b0] sm:$0xff]
    %v2409 = vld [vmem:[#allocation8 + $0x1b8] sm:$0xff]
    %v2410 = vld [vmem:[#allocation8 + $0x1c0] sm:$0xff]
    %v2411 = vld [vmem:[#allocation8 + $0x1c8] sm:$0xff]
    %v2412 = vld [vmem:[#allocation8 + $0x1d0] sm:$0xff]
    %v2413 = vld [vmem:[#allocation8 + $0x1d8] sm:$0xff]
    %v2414 = vld [vmem:[#allocation8 + $0x1e0] sm:$0xff]
    %v2415 = vld [vmem:[#allocation8 + $0x1e8] sm:$0xff]
    %v2416 = vld [vmem:[#allocation8 + $0x1f0] sm:$0x33]
    %v2417 = vld [vmem:[%s6] sm:$0x3]
    %v2419 = vperm.slane %v2417, 0
    %v2420 = vperm.slane %v2417, 1
    %v2486 = vunpack.c.l.b16 %v2354
    %v2487 = vunpack.c.h.b16 %v2354
    %v2488 = vunpack.c.l.b16 %v2355
    %v2489 = vunpack.c.h.b16 %v2355
    %v2490 = vunpack.c.l.b16 %v2356
    %v2491 = vunpack.c.h.b16 %v2356
    %v2492 = vunpack.c.l.b16 %v2357
    %v2493 = vunpack.c.h.b16 %v2357
    %v2494 = vunpack.c.l.b16 %v2358
    %v2495 = vunpack.c.h.b16 %v2358
    %v2496 = vunpack.c.l.b16 %v2359
    %v2497 = vunpack.c.h.b16 %v2359
    %v2498 = vunpack.c.l.b16 %v2360
    %v2499 = vunpack.c.h.b16 %v2360
    %v2500 = vunpack.c.l.b16 %v2361
    %v2501 = vunpack.c.h.b16 %v2361
    %v2502 = vunpack.c.l.b16 %v2362
    %v2503 = vunpack.c.h.b16 %v2362
    %v2504 = vunpack.c.l.b16 %v2363
    %v2505 = vunpack.c.h.b16 %v2363
    %v2506 = vunpack.c.l.b16 %v2364
    %v2507 = vunpack.c.h.b16 %v2364
    %v2508 = vunpack.c.l.b16 %v2365
    %v2509 = vunpack.c.h.b16 %v2365
    %v2510 = vunpack.c.l.b16 %v2366
    %v2511 = vunpack.c.h.b16 %v2366
    %v2512 = vunpack.c.l.b16 %v2367
    %v2513 = vunpack.c.h.b16 %v2367
    %v2514 = vunpack.c.l.b16 %v2368
    %v2515 = vunpack.c.h.b16 %v2368
    %v2516 = vunpack.c.l.b16 %v2369
    %v2517 = vunpack.c.h.b16 %v2369
    %v2518 = vunpack.c.l.b16 %v2370
    %v2519 = vunpack.c.h.b16 %v2370
    %v2520 = vunpack.c.l.b16 %v2371
    %v2521 = vunpack.c.h.b16 %v2371
    %v2522 = vunpack.c.l.b16 %v2372
    %v2523 = vunpack.c.h.b16 %v2372
    %v2524 = vunpack.c.l.b16 %v2373
    %v2525 = vunpack.c.h.b16 %v2373
    %v2526 = vunpack.c.l.b16 %v2374
    %v2527 = vunpack.c.h.b16 %v2374
    %v2528 = vunpack.c.l.b16 %v2375
    %v2529 = vunpack.c.h.b16 %v2375
    %v2530 = vunpack.c.l.b16 %v2376
    %v2531 = vunpack.c.h.b16 %v2376
    %v2532 = vunpack.c.l.b16 %v2377
    %v2533 = vunpack.c.h.b16 %v2377
    %v2534 = vunpack.c.l.b16 %v2378
    %v2535 = vunpack.c.h.b16 %v2378
    %v2536 = vunpack.c.l.b16 %v2379
    %v2537 = vunpack.c.h.b16 %v2379
    %v2538 = vunpack.c.l.b16 %v2380
    %v2539 = vunpack.c.h.b16 %v2380
    %v2540 = vunpack.c.l.b16 %v2381
    %v2541 = vunpack.c.h.b16 %v2381
    %v2542 = vunpack.c.l.b16 %v2382
    %v2543 = vunpack.c.h.b16 %v2382
    %v2544 = vunpack.c.l.b16 %v2383
    %v2545 = vunpack.c.h.b16 %v2383
    %v2546 = vunpack.c.l.b16 %v2384
    %v2547 = vunpack.c.h.b16 %v2384
    %v2548 = vunpack.c.l.b16 %v2385
    %v2549 = vunpack.c.h.b16 %v2385
    %v2550 = vunpack.c.l.b16 %v2386
    %v2551 = vunpack.c.h.b16 %v2386
    %v2552 = vunpack.c.l.b16 %v2387
    %v2553 = vunpack.c.h.b16 %v2387
    %v2554 = vunpack.c.l.b16 %v2388
    %v2555 = vunpack.c.h.b16 %v2388
    %v2556 = vunpack.c.l.b16 %v2389
    %v2557 = vunpack.c.h.b16 %v2389
    %v2558 = vunpack.c.l.b16 %v2390
    %v2559 = vunpack.c.h.b16 %v2390
    %v2560 = vunpack.c.l.b16 %v2391
    %v2561 = vunpack.c.h.b16 %v2391
    %v2562 = vunpack.c.l.b16 %v2392
    %v2563 = vunpack.c.h.b16 %v2392
    %v2564 = vunpack.c.l.b16 %v2393
    %v2565 = vunpack.c.h.b16 %v2393
    %v2566 = vunpack.c.l.b16 %v2394
    %v2567 = vunpack.c.h.b16 %v2394
    %v2568 = vunpack.c.l.b16 %v2395
    %v2569 = vunpack.c.h.b16 %v2395
    %v2570 = vunpack.c.l.b16 %v2396
    %v2571 = vunpack.c.h.b16 %v2396
    %v2572 = vunpack.c.l.b16 %v2397
    %v2573 = vunpack.c.h.b16 %v2397
    %v2574 = vunpack.c.l.b16 %v2398
    %v2575 = vunpack.c.h.b16 %v2398
    %v2576 = vunpack.c.l.b16 %v2399
    %v2577 = vunpack.c.h.b16 %v2399
    %v2578 = vunpack.c.l.b16 %v2400
    %v2579 = vunpack.c.h.b16 %v2400
    %v2580 = vunpack.c.l.b16 %v2401
    %v2581 = vunpack.c.h.b16 %v2401
    %v2582 = vunpack.c.l.b16 %v2402
    %v2583 = vunpack.c.h.b16 %v2402
    %v2584 = vunpack.c.l.b16 %v2403
    %v2585 = vunpack.c.h.b16 %v2403
    %v2586 = vunpack.c.l.b16 %v2404
    %v2587 = vunpack.c.h.b16 %v2404
    %v2588 = vunpack.c.l.b16 %v2405
    %v2589 = vunpack.c.h.b16 %v2405
    %v2590 = vunpack.c.l.b16 %v2406
    %v2591 = vunpack.c.h.b16 %v2406
    %v2592 = vunpack.c.l.b16 %v2407
    %v2593 = vunpack.c.h.b16 %v2407
    %v2594 = vunpack.c.l.b16 %v2408
    %v2595 = vunpack.c.h.b16 %v2408
    %v2596 = vunpack.c.l.b16 %v2409
    %v2597 = vunpack.c.h.b16 %v2409
    %v2598 = vunpack.c.l.b16 %v2410
    %v2599 = vunpack.c.h.b16 %v2410
    %v2600 = vunpack.c.l.b16 %v2411
    %v2601 = vunpack.c.h.b16 %v2411
    %v2602 = vunpack.c.l.b16 %v2412
    %v2603 = vunpack.c.h.b16 %v2412
    %v2604 = vunpack.c.l.b16 %v2413
    %v2605 = vunpack.c.h.b16 %v2413
    %v2606 = vunpack.c.l.b16 %v2414
    %v2607 = vunpack.c.h.b16 %v2414
    %v2608 = vunpack.c.l.b16 %v2415
    %v2609 = vunpack.c.h.b16 %v2415
    %v2610 = vunpack.c.l.b16 %v2416
    %v2611 = vunpack.c.h.b16 %v2416
    %v2612 = vpack.c.b16 %v2488, %v2486
    %v2613 = vpack.c.b16 %v2489, %v2487
    %v2614 = vpack.c.b16 %v2492, %v2490
    %v2615 = vpack.c.b16 %v2493, %v2491
    %v2616 = vpack.c.b16 %v2496, %v2494
    %v2617 = vpack.c.b16 %v2497, %v2495
    %v2618 = vpack.c.b16 %v2500, %v2498
    %v2619 = vpack.c.b16 %v2501, %v2499
    %v2620 = vpack.c.b16 %v2504, %v2502
    %v2621 = vpack.c.b16 %v2505, %v2503
    %v2622 = vpack.c.b16 %v2508, %v2506
    %v2623 = vpack.c.b16 %v2509, %v2507
    %v2624 = vpack.c.b16 %v2512, %v2510
    %v2625 = vpack.c.b16 %v2513, %v2511
    %v2626 = vpack.c.b16 %v2516, %v2514
    %v2627 = vpack.c.b16 %v2517, %v2515
    %v2628 = vpack.c.b16 %v2520, %v2518
    %v2629 = vpack.c.b16 %v2521, %v2519
    %v2630 = vpack.c.b16 %v2524, %v2522
    %v2631 = vpack.c.b16 %v2525, %v2523
    %v2632 = vpack.c.b16 %v2528, %v2526
    %v2633 = vpack.c.b16 %v2529, %v2527
    %v2634 = vpack.c.b16 %v2532, %v2530
    %v2635 = vpack.c.b16 %v2533, %v2531
    %v2636 = vpack.c.b16 %v2536, %v2534
    %v2637 = vpack.c.b16 %v2537, %v2535
    %v2638 = vpack.c.b16 %v2540, %v2538
    %v2639 = vpack.c.b16 %v2541, %v2539
    %v2640 = vpack.c.b16 %v2544, %v2542
    %v2641 = vpack.c.b16 %v2545, %v2543
    %v2642 = vpack.c.b16 %v2548, %v2546
    %v2643 = vpack.c.b16 %v2549, %v2547
    %v2644 = vpack.c.b16 %v2552, %v2550
    %v2645 = vpack.c.b16 %v2553, %v2551
    %v2646 = vpack.c.b16 %v2556, %v2554
    %v2647 = vpack.c.b16 %v2557, %v2555
    %v2648 = vpack.c.b16 %v2560, %v2558
    %v2649 = vpack.c.b16 %v2561, %v2559
    %v2650 = vpack.c.b16 %v2564, %v2562
    %v2651 = vpack.c.b16 %v2565, %v2563
    %v2652 = vpack.c.b16 %v2568, %v2566
    %v2653 = vpack.c.b16 %v2569, %v2567
    %v2654 = vpack.c.b16 %v2572, %v2570
    %v2655 = vpack.c.b16 %v2573, %v2571
    %v2656 = vpack.c.b16 %v2576, %v2574
    %v2657 = vpack.c.b16 %v2577, %v2575
    %v2658 = vpack.c.b16 %v2580, %v2578
    %v2659 = vpack.c.b16 %v2581, %v2579
    %v2660 = vpack.c.b16 %v2584, %v2582
    %v2661 = vpack.c.b16 %v2585, %v2583
    %v2662 = vpack.c.b16 %v2588, %v2586
    %v2663 = vpack.c.b16 %v2589, %v2587
    %v2664 = vpack.c.b16 %v2592, %v2590
    %v2665 = vpack.c.b16 %v2593, %v2591
    %v2666 = vpack.c.b16 %v2596, %v2594
    %v2667 = vpack.c.b16 %v2597, %v2595
    %v2668 = vpack.c.b16 %v2600, %v2598
    %v2669 = vpack.c.b16 %v2601, %v2599
    %v2670 = vpack.c.b16 %v2604, %v2602
    %v2671 = vpack.c.b16 %v2605, %v2603
    %v2672 = vpack.c.b16 %v2608, %v2606
    %v2673 = vpack.c.b16 %v2609, %v2607
    %v2674 = vpack.c.b16 %v2610, %v2610
    %v2675 = vpack.c.b16 %v2611, %v2611
    %vm2738 = vcmask 949248
    %v2740 = vsel %vm2738, %v2353, 0
    %vm2742 = vcmask 1041408
    %v2744 = vsel %vm2742, %v2674, 0
    %v2747 = vsel %vm2742, %v2675, 0
    %2749 = vmatpush.bf16.msra.mxu0 %v2626
    %2750 = vmatpush.bf16.msra.mxu0 %v2624
    %2751 = vmatpush.bf16.msra.mxu0 %v2622
    %2752 = vmatpush.bf16.msra.mxu0 %v2620
    %2753 = vmatpush.bf16.msra.mxu0 %v2618
    %2754 = vmatpush.bf16.msra.mxu0 %v2616
    %2755 = vmatpush.bf16.msra.mxu0 %v2614
    %2756 = vmatpush.bf16.msra.mxu0 %v2612
    %2757 = vmatmul.bf16.gmra.mxu0 %v2350
    %v2758 = vpop.f32.mrf.mxu0
    %v2759 = vadd.f32 %v2419, %v2758
    %v2760 = vpop.f32.mrf.mxu0
    %2761 = vdwg.mxu0
    %2762 = vmatpush.bf16.msra.mxu0 %v2642
    %2763 = vmatpush.bf16.msra.mxu0 %v2640
    %2764 = vmatpush.bf16.msra.mxu0 %v2638
    %2765 = vmatpush.bf16.msra.mxu0 %v2636
    %2766 = vmatpush.bf16.msra.mxu0 %v2634
    %2767 = vmatpush.bf16.msra.mxu0 %v2632
    %2768 = vmatpush.bf16.msra.mxu0 %v2630
    %2769 = vmatpush.bf16.msra.mxu0 %v2628
    %2770 = vmatmul.bf16.gmra.mxu0 %v2351
    %v2771 = vpop.f32.mrf.mxu0
    %v2772 = vadd.f32 %v2759, %v2771
    %v2773 = vpop.f32.mrf.mxu0
    %2774 = vdwg.mxu0
    %2775 = vmatpush.bf16.msra.mxu0 %v2658
    %2776 = vmatpush.bf16.msra.mxu0 %v2656
    %2777 = vmatpush.bf16.msra.mxu0 %v2654
    %2778 = vmatpush.bf16.msra.mxu0 %v2652
    %2779 = vmatpush.bf16.msra.mxu0 %v2650
    %2780 = vmatpush.bf16.msra.mxu0 %v2648
    %2781 = vmatpush.bf16.msra.mxu0 %v2646
    %2782 = vmatpush.bf16.msra.mxu0 %v2644
    %2783 = vmatmul.bf16.gmra.mxu0 %v2352
    %v2784 = vpop.f32.mrf.mxu0
    %v2785 = vadd.f32 %v2772, %v2784
    %v2786 = vpop.f32.mrf.mxu0
    %2787 = vdwg.mxu0
    %2788 = vmatpush.bf16.msra.mxu0 %v2744
    %2789 = vmatpush.bf16.msra.mxu0 %v2672
    %2790 = vmatpush.bf16.msra.mxu0 %v2670
    %2791 = vmatpush.bf16.msra.mxu0 %v2668
    %2792 = vmatpush.bf16.msra.mxu0 %v2666
    %2793 = vmatpush.bf16.msra.mxu0 %v2664
    %2794 = vmatpush.bf16.msra.mxu0 %v2662
    %2795 = vmatpush.bf16.msra.mxu0 %v2660
    %2796 = vmatmul.bf16.gmra.mxu0 %v2740
    %v2797 = vpop.f32.mrf.mxu0
    %v2798 = vadd.f32 %v2785, %v2797
    %v2799 = vpop.f32.mrf.mxu0
    %2800 = vdwg.mxu0
    %2801 = vmatpush.bf16.msra.mxu0 %v2627
    %2802 = vmatpush.bf16.msra.mxu0 %v2625
    %2803 = vmatpush.bf16.msra.mxu0 %v2623
    %2804 = vmatpush.bf16.msra.mxu0 %v2621
    %2805 = vmatpush.bf16.msra.mxu0 %v2619
    %2806 = vmatpush.bf16.msra.mxu0 %v2617
    %2807 = vmatpush.bf16.msra.mxu0 %v2615
    %2808 = vmatpush.bf16.msra.mxu0 %v2613
    %2809 = vmatmul.bf16.gmra.mxu0 %v2350
    %v2810 = vpop.f32.mrf.mxu0
    %v2811 = vadd.f32 %v2420, %v2810
    %v2812 = vpop.f32.mrf.mxu0
    %2813 = vdwg.mxu0
    %2814 = vmatpush.bf16.msra.mxu0 %v2643
    %2815 = vmatpush.bf16.msra.mxu0 %v2641
    %2816 = vmatpush.bf16.msra.mxu0 %v2639
    %2817 = vmatpush.bf16.msra.mxu0 %v2637
    %2818 = vmatpush.bf16.msra.mxu0 %v2635
    %2819 = vmatpush.bf16.msra.mxu0 %v2633
    %2820 = vmatpush.bf16.msra.mxu0 %v2631
    %2821 = vmatpush.bf16.msra.mxu0 %v2629
    %2822 = vmatmul.bf16.gmra.mxu0 %v2351
    %v2823 = vpop.f32.mrf.mxu0
    %v2824 = vadd.f32 %v2811, %v2823
    %v2825 = vpop.f32.mrf.mxu0
    %2826 = vdwg.mxu0
    %2827 = vmatpush.bf16.msra.mxu0 %v2659
    %2828 = vmatpush.bf16.msra.mxu0 %v2657
    %2829 = vmatpush.bf16.msra.mxu0 %v2655
    %2830 = vmatpush.bf16.msra.mxu0 %v2653
    %2831 = vmatpush.bf16.msra.mxu0 %v2651
    %2832 = vmatpush.bf16.msra.mxu0 %v2649
    %2833 = vmatpush.bf16.msra.mxu0 %v2647
    %2834 = vmatpush.bf16.msra.mxu0 %v2645
    %2835 = vmatmul.bf16.gmra.mxu0 %v2352
    %v2836 = vpop.f32.mrf.mxu0
    %v2837 = vadd.f32 %v2824, %v2836
    %v2838 = vpop.f32.mrf.mxu0
    %2839 = vdwg.mxu0
    %2840 = vmatpush.bf16.msra.mxu0 %v2747
    %2841 = vmatpush.bf16.msra.mxu0 %v2673
    %2842 = vmatpush.bf16.msra.mxu0 %v2671
    %2843 = vmatpush.bf16.msra.mxu0 %v2669
    %2844 = vmatpush.bf16.msra.mxu0 %v2667
    %2845 = vmatpush.bf16.msra.mxu0 %v2665
    %2846 = vmatpush.bf16.msra.mxu0 %v2663
    %2847 = vmatpush.bf16.msra.mxu0 %v2661
    %2848 = vmatmul.bf16.gmra.mxu0 %v2740
    %v2849 = vpop.f32.mrf.mxu0
    %v2850 = vadd.f32 %v2837, %v2849
    %v2851 = vpop.f32.mrf.mxu0
    %2852 = vdwg.mxu0
    %v2853 = vmax.f32 %v2798, 0.0
    %v2854 = vmax.f32 %v2850, 0.0
    %v2855 = vpack.c.bf16 %v2853, %v2853
    %v2856 = vpack.c.bf16 %v2854, %v2854
    %v2857 = vld [vmem:[#allocation10] sm:$0xff]
    %v2858 = vld [vmem:[#allocation10 + $0x8] sm:$0xff]
    %v2859 = vld [vmem:[#allocation10 + $0x10] sm:$0xff]
    %v2860 = vld [vmem:[#allocation10 + $0x18] sm:$0xff]
    %v2861 = vld [vmem:[#allocation10 + $0x20] sm:$0xff]
    %v2862 = vld [vmem:[#allocation10 + $0x28] sm:$0xff]
    %v2863 = vld [vmem:[#allocation10 + $0x30] sm:$0xff]
    %v2864 = vld [vmem:[#allocation10 + $0x38] sm:$0xff]
    %v2865 = vld [vmem:[#allocation10 + $0x40] sm:$0xff]
    %v2866 = vld [vmem:[#allocation10 + $0x48] sm:$0xff]
    %v2867 = vld [vmem:[#allocation10 + $0x50] sm:$0xff]
    %v2868 = vld [vmem:[#allocation10 + $0x58] sm:$0xff]
    %v2869 = vld [vmem:[#allocation10 + $0x60] sm:$0xff]
    %v2870 = vld [vmem:[#allocation10 + $0x68] sm:$0xff]
    %v2871 = vld [vmem:[#allocation10 + $0x70] sm:$0xff]
    %v2872 = vld [vmem:[#allocation10 + $0x78] sm:$0xff]
    %v2873 = vld [vmem:[#allocation10 + $0x80] sm:$0xff]
    %v2874 = vld [vmem:[#allocation10 + $0x88] sm:$0xff]
    %v2875 = vld [vmem:[#allocation10 + $0x90] sm:$0xff]
    %v2876 = vld [vmem:[#allocation10 + $0x98] sm:$0xff]
    %v2877 = vld [vmem:[#allocation10 + $0xa0] sm:$0xff]
    %v2878 = vld [vmem:[#allocation10 + $0xa8] sm:$0xff]
    %v2879 = vld [vmem:[#allocation10 + $0xb0] sm:$0xff]
    %v2880 = vld [vmem:[#allocation10 + $0xb8] sm:$0xff]
    %v2881 = vld [vmem:[#allocation10 + $0xc0] sm:$0xff]
    %v2882 = vld [vmem:[#allocation10 + $0xc8] sm:$0xff]
    %v2883 = vld [vmem:[#allocation10 + $0xd0] sm:$0xff]
    %v2884 = vld [vmem:[#allocation10 + $0xd8] sm:$0xff]
    %v2885 = vld [vmem:[#allocation10 + $0xe0] sm:$0xff]
    %v2886 = vld [vmem:[#allocation10 + $0xe8] sm:$0xff]
    %v2887 = vld [vmem:[#allocation10 + $0xf0] sm:$0xff]
    %v2888 = vld [vmem:[#allocation10 + $0xf8] sm:$0x11]
    %v2889 = vld [vmem:[#allocation11] sm:$0x3]
    %v2891 = vperm.slane %v2889, 0
    %v2892 = vperm.slane %v2889, 1
    %v2927 = vunpack.c.l.b16 %v2857
    %v2928 = vunpack.c.h.b16 %v2857
    %v2929 = vunpack.c.l.b16 %v2858
    %v2930 = vunpack.c.h.b16 %v2858
    %v2931 = vunpack.c.l.b16 %v2859
    %v2932 = vunpack.c.h.b16 %v2859
    %v2933 = vunpack.c.l.b16 %v2860
    %v2934 = vunpack.c.h.b16 %v2860
    %v2935 = vunpack.c.l.b16 %v2861
    %v2936 = vunpack.c.h.b16 %v2861
    %v2937 = vunpack.c.l.b16 %v2862
    %v2938 = vunpack.c.h.b16 %v2862
    %v2939 = vunpack.c.l.b16 %v2863
    %v2940 = vunpack.c.h.b16 %v2863
    %v2941 = vunpack.c.l.b16 %v2864
    %v2942 = vunpack.c.h.b16 %v2864
    %v2943 = vunpack.c.l.b16 %v2865
    %v2944 = vunpack.c.h.b16 %v2865
    %v2945 = vunpack.c.l.b16 %v2866
    %v2946 = vunpack.c.h.b16 %v2866
    %v2947 = vunpack.c.l.b16 %v2867
    %v2948 = vunpack.c.h.b16 %v2867
    %v2949 = vunpack.c.l.b16 %v2868
    %v2950 = vunpack.c.h.b16 %v2868
    %v2951 = vunpack.c.l.b16 %v2869
    %v2952 = vunpack.c.h.b16 %v2869
    %v2953 = vunpack.c.l.b16 %v2870
    %v2954 = vunpack.c.h.b16 %v2870
    %v2955 = vunpack.c.l.b16 %v2871
    %v2956 = vunpack.c.h.b16 %v2871
    %v2957 = vunpack.c.l.b16 %v2872
    %v2958 = vunpack.c.h.b16 %v2872
    %v2959 = vunpack.c.l.b16 %v2873
    %v2960 = vunpack.c.h.b16 %v2873
    %v2961 = vunpack.c.l.b16 %v2874
    %v2962 = vunpack.c.h.b16 %v2874
    %v2963 = vunpack.c.l.b16 %v2875
    %v2964 = vunpack.c.h.b16 %v2875
    %v2965 = vunpack.c.l.b16 %v2876
    %v2966 = vunpack.c.h.b16 %v2876
    %v2967 = vunpack.c.l.b16 %v2877
    %v2968 = vunpack.c.h.b16 %v2877
    %v2969 = vunpack.c.l.b16 %v2878
    %v2970 = vunpack.c.h.b16 %v2878
    %v2971 = vunpack.c.l.b16 %v2879
    %v2972 = vunpack.c.h.b16 %v2879
    %v2973 = vunpack.c.l.b16 %v2880
    %v2974 = vunpack.c.h.b16 %v2880
    %v2975 = vunpack.c.l.b16 %v2881
    %v2976 = vunpack.c.h.b16 %v2881
    %v2977 = vunpack.c.l.b16 %v2882
    %v2978 = vunpack.c.h.b16 %v2882
    %v2979 = vunpack.c.l.b16 %v2883
    %v2980 = vunpack.c.h.b16 %v2883
    %v2981 = vunpack.c.l.b16 %v2884
    %v2982 = vunpack.c.h.b16 %v2884
    %v2983 = vunpack.c.l.b16 %v2885
    %v2984 = vunpack.c.h.b16 %v2885
    %v2985 = vunpack.c.l.b16 %v2886
    %v2986 = vunpack.c.h.b16 %v2886
    %v2987 = vunpack.c.l.b16 %v2887
    %v2988 = vunpack.c.h.b16 %v2887
    %v2989 = vunpack.c.l.b16 %v2888
    %v2990 = vunpack.c.h.b16 %v2888
    %v2991 = vpack.c.b16 %v2929, %v2927
    %v2992 = vpack.c.b16 %v2930, %v2928
    %v2993 = vpack.c.b16 %v2933, %v2931
    %v2994 = vpack.c.b16 %v2934, %v2932
    %v2995 = vpack.c.b16 %v2937, %v2935
    %v2996 = vpack.c.b16 %v2938, %v2936
    %v2997 = vpack.c.b16 %v2941, %v2939
    %v2998 = vpack.c.b16 %v2942, %v2940
    %v2999 = vpack.c.b16 %v2945, %v2943
    %v3000 = vpack.c.b16 %v2946, %v2944
    %v3001 = vpack.c.b16 %v2949, %v2947
    %v3002 = vpack.c.b16 %v2950, %v2948
    %v3003 = vpack.c.b16 %v2953, %v2951
    %v3004 = vpack.c.b16 %v2954, %v2952
    %v3005 = vpack.c.b16 %v2957, %v2955
    %v3006 = vpack.c.b16 %v2958, %v2956
    %v3007 = vpack.c.b16 %v2961, %v2959
    %v3008 = vpack.c.b16 %v2962, %v2960
    %v3009 = vpack.c.b16 %v2965, %v2963
    %v3010 = vpack.c.b16 %v2966, %v2964
    %v3011 = vpack.c.b16 %v2969, %v2967
    %v3012 = vpack.c.b16 %v2970, %v2968
    %v3013 = vpack.c.b16 %v2973, %v2971
    %v3014 = vpack.c.b16 %v2974, %v2972
    %v3015 = vpack.c.b16 %v2977, %v2975
    %v3016 = vpack.c.b16 %v2978, %v2976
    %v3017 = vpack.c.b16 %v2981, %v2979
    %v3018 = vpack.c.b16 %v2982, %v2980
    %v3019 = vpack.c.b16 %v2985, %v2983
    %v3020 = vpack.c.b16 %v2986, %v2984
    %v3021 = vpack.c.b16 %v2989, %v2987
    %v3022 = vpack.c.b16 %v2990, %v2988
    %vm3053 = vcmask 998400
    %v3055 = vsel %vm3053, %v2856, 0
    %vm3057 = vcmask 1044480
    %v3059 = vsel %vm3057, %v3021, 0
    %v3062 = vsel %vm3057, %v3022, 0
    %3064 = vmatpush.bf16.msra.mxu0 %v3005
    %3065 = vmatpush.bf16.msra.mxu0 %v3003
    %3066 = vmatpush.bf16.msra.mxu0 %v3001
    %3067 = vmatpush.bf16.msra.mxu0 %v2999
    %3068 = vmatpush.bf16.msra.mxu0 %v2997
    %3069 = vmatpush.bf16.msra.mxu0 %v2995
    %3070 = vmatpush.bf16.msra.mxu0 %v2993
    %3071 = vmatpush.bf16.msra.mxu0 %v2991
    %3072 = vmatmul.bf16.gmra.mxu0 %v2855
    %v3073 = vpop.f32.mrf.mxu0
    %v3074 = vadd.f32 %v2891, %v3073
    %v3075 = vpop.f32.mrf.mxu0
    %3076 = vdwg.mxu0
    %3077 = vmatpush.bf16.msra.mxu0 %v3059
    %3078 = vmatpush.bf16.msra.mxu0 %v3019
    %3079 = vmatpush.bf16.msra.mxu0 %v3017
    %3080 = vmatpush.bf16.msra.mxu0 %v3015
    %3081 = vmatpush.bf16.msra.mxu0 %v3013
    %3082 = vmatpush.bf16.msra.mxu0 %v3011
    %3083 = vmatpush.bf16.msra.mxu0 %v3009
    %3084 = vmatpush.bf16.msra.mxu0 %v3007
    %3085 = vmatmul.bf16.gmra.mxu0 %v3055
    %v3086 = vpop.f32.mrf.mxu0
    %v3087 = vadd.f32 %v3074, %v3086
    %v3088 = vpop.f32.mrf.mxu0
    %3089 = vdwg.mxu0
    %3090 = vmatpush.bf16.msra.mxu0 %v3006
    %3091 = vmatpush.bf16.msra.mxu0 %v3004
    %3092 = vmatpush.bf16.msra.mxu0 %v3002
    %3093 = vmatpush.bf16.msra.mxu0 %v3000
    %3094 = vmatpush.bf16.msra.mxu0 %v2998
    %3095 = vmatpush.bf16.msra.mxu0 %v2996
    %3096 = vmatpush.bf16.msra.mxu0 %v2994
    %3097 = vmatpush.bf16.msra.mxu0 %v2992
    %3098 = vmatmul.bf16.gmra.mxu0 %v2855
    %v3099 = vpop.f32.mrf.mxu0
    %v3100 = vadd.f32 %v2892, %v3099
    %v3101 = vpop.f32.mrf.mxu0
    %3102 = vdwg.mxu0
    %3103 = vmatpush.bf16.msra.mxu0 %v3062
    %3104 = vmatpush.bf16.msra.mxu0 %v3020
    %3105 = vmatpush.bf16.msra.mxu0 %v3018
    %3106 = vmatpush.bf16.msra.mxu0 %v3016
    %3107 = vmatpush.bf16.msra.mxu0 %v3014
    %3108 = vmatpush.bf16.msra.mxu0 %v3012
    %3109 = vmatpush.bf16.msra.mxu0 %v3010
    %3110 = vmatpush.bf16.msra.mxu0 %v3008
    %3111 = vmatmul.bf16.gmra.mxu0 %v3055
    %v3112 = vpop.f32.mrf.mxu0
    %v3113 = vadd.f32 %v3100, %v3112
    %v3114 = vpop.f32.mrf.mxu0
    %3115 = vdwg.mxu0
    %v3116 = vmax.f32 %v3087, 0.0
    %v3117 = vmax.f32 %v3113, 0.0
    %v3118 = vpack.c.bf16 %v3116, %v3116
    %v3119 = vpack.c.bf16 %v3117, %v3117
    %v3120 = vld [vmem:[#allocation13] sm:$0xff]
    %v3121 = vld [vmem:[#allocation13 + $0x8] sm:$0xff]
    %v3122 = vld [vmem:[#allocation13 + $0x10] sm:$0xff]
    %v3123 = vld [vmem:[#allocation13 + $0x18] sm:$0xff]
    %v3124 = vld [vmem:[#allocation13 + $0x20] sm:$0xff]
    %v3125 = vld [vmem:[#allocation13 + $0x28] sm:$0xff]
    %v3126 = vld [vmem:[#allocation13 + $0x30] sm:$0xff]
    %v3127 = vld [vmem:[#allocation13 + $0x38] sm:$0xff]
    %v3128 = vld [vmem:[#allocation13 + $0x40] sm:$0xff]
    %v3129 = vld [vmem:[#allocation13 + $0x48] sm:$0xff]
    %v3130 = vld [vmem:[#allocation13 + $0x50] sm:$0xff]
    %v3131 = vld [vmem:[#allocation13 + $0x58] sm:$0xff]
    %v3132 = vld [vmem:[#allocation13 + $0x60] sm:$0xff]
    %v3133 = vld [vmem:[#allocation13 + $0x68] sm:$0xff]
    %v3134 = vld [vmem:[#allocation13 + $0x70] sm:$0xff]
    %v3135 = vld [vmem:[#allocation13 + $0x78] sm:$0xff]
    %v3136 = vld [vmem:[#allocation13 + $0x80] sm:$0xff]
    %v3137 = vld [vmem:[#allocation13 + $0x88] sm:$0xff]
    %v3138 = vld [vmem:[#allocation13 + $0x90] sm:$0xff]
    %v3139 = vld [vmem:[#allocation13 + $0x98] sm:$0xff]
    %v3140 = vld [vmem:[#allocation13 + $0xa0] sm:$0xff]
    %v3141 = vld [vmem:[#allocation13 + $0xa8] sm:$0xff]
    %v3142 = vld [vmem:[#allocation13 + $0xb0] sm:$0xff]
    %v3143 = vld [vmem:[#allocation13 + $0xb8] sm:$0xff]
    %v3144 = vld [vmem:[#allocation13 + $0xc0] sm:$0xff]
    %v3145 = vld [vmem:[#allocation13 + $0xc8] sm:$0xff]
    %v3146 = vld [vmem:[#allocation13 + $0xd0] sm:$0xff]
    %v3147 = vld [vmem:[#allocation13 + $0xd8] sm:$0xff]
    %v3148 = vld [vmem:[#allocation13 + $0xe0] sm:$0xff]
    %v3149 = vld [vmem:[#allocation13 + $0xe8] sm:$0xff]
    %v3150 = vld [vmem:[#allocation13 + $0xf0] sm:$0xff]
    %v3151 = vld [vmem:[#allocation13 + $0xf8] sm:$0x11]
    %v3152 = vld [vmem:[#allocation14] sm:$0x3]
    %v3154 = vperm.slane %v3152, 0
    %v3155 = vperm.slane %v3152, 1
    %v3190 = vunpack.c.l.b16 %v3120
    %v3191 = vunpack.c.h.b16 %v3120
    %v3192 = vunpack.c.l.b16 %v3121
    %v3193 = vunpack.c.h.b16 %v3121
    %v3194 = vunpack.c.l.b16 %v3122
    %v3195 = vunpack.c.h.b16 %v3122
    %v3196 = vunpack.c.l.b16 %v3123
    %v3197 = vunpack.c.h.b16 %v3123
    %v3198 = vunpack.c.l.b16 %v3124
    %v3199 = vunpack.c.h.b16 %v3124
    %v3200 = vunpack.c.l.b16 %v3125
    %v3201 = vunpack.c.h.b16 %v3125
    %v3202 = vunpack.c.l.b16 %v3126
    %v3203 = vunpack.c.h.b16 %v3126
    %v3204 = vunpack.c.l.b16 %v3127
    %v3205 = vunpack.c.h.b16 %v3127
    %v3206 = vunpack.c.l.b16 %v3128
    %v3207 = vunpack.c.h.b16 %v3128
    %v3208 = vunpack.c.l.b16 %v3129
    %v3209 = vunpack.c.h.b16 %v3129
    %v3210 = vunpack.c.l.b16 %v3130
    %v3211 = vunpack.c.h.b16 %v3130
    %v3212 = vunpack.c.l.b16 %v3131
    %v3213 = vunpack.c.h.b16 %v3131
    %v3214 = vunpack.c.l.b16 %v3132
    %v3215 = vunpack.c.h.b16 %v3132
    %v3216 = vunpack.c.l.b16 %v3133
    %v3217 = vunpack.c.h.b16 %v3133
    %v3218 = vunpack.c.l.b16 %v3134
    %v3219 = vunpack.c.h.b16 %v3134
    %v3220 = vunpack.c.l.b16 %v3135
    %v3221 = vunpack.c.h.b16 %v3135
    %v3222 = vunpack.c.l.b16 %v3136
    %v3223 = vunpack.c.h.b16 %v3136
    %v3224 = vunpack.c.l.b16 %v3137
    %v3225 = vunpack.c.h.b16 %v3137
    %v3226 = vunpack.c.l.b16 %v3138
    %v3227 = vunpack.c.h.b16 %v3138
    %v3228 = vunpack.c.l.b16 %v3139
    %v3229 = vunpack.c.h.b16 %v3139
    %v3230 = vunpack.c.l.b16 %v3140
    %v3231 = vunpack.c.h.b16 %v3140
    %v3232 = vunpack.c.l.b16 %v3141
    %v3233 = vunpack.c.h.b16 %v3141
    %v3234 = vunpack.c.l.b16 %v3142
    %v3235 = vunpack.c.h.b16 %v3142
    %v3236 = vunpack.c.l.b16 %v3143
    %v3237 = vunpack.c.h.b16 %v3143
    %v3238 = vunpack.c.l.b16 %v3144
    %v3239 = vunpack.c.h.b16 %v3144
    %v3240 = vunpack.c.l.b16 %v3145
    %v3241 = vunpack.c.h.b16 %v3145
    %v3242 = vunpack.c.l.b16 %v3146
    %v3243 = vunpack.c.h.b16 %v3146
    %v3244 = vunpack.c.l.b16 %v3147
    %v3245 = vunpack.c.h.b16 %v3147
    %v3246 = vunpack.c.l.b16 %v3148
    %v3247 = vunpack.c.h.b16 %v3148
    %v3248 = vunpack.c.l.b16 %v3149
    %v3249 = vunpack.c.h.b16 %v3149
    %v3250 = vunpack.c.l.b16 %v3150
    %v3251 = vunpack.c.h.b16 %v3150
    %v3252 = vunpack.c.l.b16 %v3151
    %v3253 = vunpack.c.h.b16 %v3151
    %v3254 = vpack.c.b16 %v3192, %v3190
    %v3255 = vpack.c.b16 %v3193, %v3191
    %v3256 = vpack.c.b16 %v3196, %v3194
    %v3257 = vpack.c.b16 %v3197, %v3195
    %v3258 = vpack.c.b16 %v3200, %v3198
    %v3259 = vpack.c.b16 %v3201, %v3199
    %v3260 = vpack.c.b16 %v3204, %v3202
    %v3261 = vpack.c.b16 %v3205, %v3203
    %v3262 = vpack.c.b16 %v3208, %v3206
    %v3263 = vpack.c.b16 %v3209, %v3207
    %v3264 = vpack.c.b16 %v3212, %v3210
    %v3265 = vpack.c.b16 %v3213, %v3211
    %v3266 = vpack.c.b16 %v3216, %v3214
    %v3267 = vpack.c.b16 %v3217, %v3215
    %v3268 = vpack.c.b16 %v3220, %v3218
    %v3269 = vpack.c.b16 %v3221, %v3219
    %v3270 = vpack.c.b16 %v3224, %v3222
    %v3271 = vpack.c.b16 %v3225, %v3223
    %v3272 = vpack.c.b16 %v3228, %v3226
    %v3273 = vpack.c.b16 %v3229, %v3227
    %v3274 = vpack.c.b16 %v3232, %v3230
    %v3275 = vpack.c.b16 %v3233, %v3231
    %v3276 = vpack.c.b16 %v3236, %v3234
    %v3277 = vpack.c.b16 %v3237, %v3235
    %v3278 = vpack.c.b16 %v3240, %v3238
    %v3279 = vpack.c.b16 %v3241, %v3239
    %v3280 = vpack.c.b16 %v3244, %v3242
    %v3281 = vpack.c.b16 %v3245, %v3243
    %v3282 = vpack.c.b16 %v3248, %v3246
    %v3283 = vpack.c.b16 %v3249, %v3247
    %v3284 = vpack.c.b16 %v3252, %v3250
    %v3285 = vpack.c.b16 %v3253, %v3251
    %v3317 = vsel %vm3053, %v3119, 0
    %v3320 = vsel %vm3057, %v3284, 0
    %v3323 = vsel %vm3057, %v3285, 0
    %3325 = vmatpush.bf16.msra.mxu0 %v3268
    %3326 = vmatpush.bf16.msra.mxu0 %v3266
    %3327 = vmatpush.bf16.msra.mxu0 %v3264
    %3328 = vmatpush.bf16.msra.mxu0 %v3262
    %3329 = vmatpush.bf16.msra.mxu0 %v3260
    %3330 = vmatpush.bf16.msra.mxu0 %v3258
    %3331 = vmatpush.bf16.msra.mxu0 %v3256
    %3332 = vmatpush.bf16.msra.mxu0 %v3254
    %3333 = vmatmul.bf16.gmra.mxu0 %v3118
    %v3334 = vpop.f32.mrf.mxu0
    %v3335 = vadd.f32 %v3154, %v3334
    %v3336 = vpop.f32.mrf.mxu0
    %3337 = vdwg.mxu0
    %3338 = vmatpush.bf16.msra.mxu0 %v3320
    %3339 = vmatpush.bf16.msra.mxu0 %v3282
    %3340 = vmatpush.bf16.msra.mxu0 %v3280
    %3341 = vmatpush.bf16.msra.mxu0 %v3278
    %3342 = vmatpush.bf16.msra.mxu0 %v3276
    %3343 = vmatpush.bf16.msra.mxu0 %v3274
    %3344 = vmatpush.bf16.msra.mxu0 %v3272
    %3345 = vmatpush.bf16.msra.mxu0 %v3270
    %3346 = vmatmul.bf16.gmra.mxu0 %v3317
    %v3347 = vpop.f32.mrf.mxu0
    %v3348 = vadd.f32 %v3335, %v3347
    %v3349 = vpop.f32.mrf.mxu0
    %3350 = vdwg.mxu0
    %3351 = vmatpush.bf16.msra.mxu0 %v3269
    %3352 = vmatpush.bf16.msra.mxu0 %v3267
    %3353 = vmatpush.bf16.msra.mxu0 %v3265
    %3354 = vmatpush.bf16.msra.mxu0 %v3263
    %3355 = vmatpush.bf16.msra.mxu0 %v3261
    %3356 = vmatpush.bf16.msra.mxu0 %v3259
    %3357 = vmatpush.bf16.msra.mxu0 %v3257
    %3358 = vmatpush.bf16.msra.mxu0 %v3255
    %3359 = vmatmul.bf16.gmra.mxu0 %v3118
    %v3360 = vpop.f32.mrf.mxu0
    %v3361 = vadd.f32 %v3155, %v3360
    %v3362 = vpop.f32.mrf.mxu0
    %3363 = vdwg.mxu0
    %3364 = vmatpush.bf16.msra.mxu0 %v3323
    %3365 = vmatpush.bf16.msra.mxu0 %v3283
    %3366 = vmatpush.bf16.msra.mxu0 %v3281
    %3367 = vmatpush.bf16.msra.mxu0 %v3279
    %3368 = vmatpush.bf16.msra.mxu0 %v3277
    %3369 = vmatpush.bf16.msra.mxu0 %v3275
    %3370 = vmatpush.bf16.msra.mxu0 %v3273
    %3371 = vmatpush.bf16.msra.mxu0 %v3271
    %3372 = vmatmul.bf16.gmra.mxu0 %v3317
    %v3373 = vpop.f32.mrf.mxu0
    %v3374 = vadd.f32 %v3361, %v3373
    %v3375 = vpop.f32.mrf.mxu0
    %3376 = vdwg.mxu0
    %v3377 = vmax.f32 %v3348, 0.0
    %v3378 = vmax.f32 %v3374, 0.0
    %v3379 = vpack.c.bf16 %v3377, %v3377
    %v3380 = vpack.c.bf16 %v3378, %v3378
    %v3381 = vld [vmem:[%s11] sm:$0xf]
    %v3382 = vld [vmem:[%s11 + $0x4] sm:$0xf]
    %v3383 = vld [vmem:[%s11 + $0x8] sm:$0xf]
    %v3384 = vld [vmem:[%s11 + $0xc] sm:$0xf]
    %v3385 = vld [vmem:[%s11 + $0x10] sm:$0xf]
    %v3386 = vld [vmem:[%s11 + $0x14] sm:$0xf]
    %v3387 = vld [vmem:[%s11 + $0x18] sm:$0xf]
    %v3388 = vld [vmem:[%s11 + $0x1c] sm:$0xf]
    %v3389 = vld [vmem:[%s11 + $0x20] sm:$0xf]
    %v3390 = vld [vmem:[%s11 + $0x24] sm:$0xf]
    %v3391 = vld [vmem:[%s11 + $0x28] sm:$0xf]
    %v3392 = vld [vmem:[%s11 + $0x2c] sm:$0xf]
    %v3393 = vld [vmem:[%s11 + $0x30] sm:$0xf]
    %v3394 = vld [vmem:[%s11 + $0x34] sm:$0xf]
    %v3395 = vld [vmem:[%s11 + $0x38] sm:$0xf]
    %v3396 = vld [vmem:[%s11 + $0x3c] sm:$0xf]
    %v3397 = vld [vmem:[%s11 + $0x40] sm:$0xf]
    %v3398 = vld [vmem:[%s11 + $0x44] sm:$0xf]
    %v3399 = vld [vmem:[%s11 + $0x48] sm:$0xf]
    %v3400 = vld [vmem:[%s11 + $0x4c] sm:$0xf]
    %v3401 = vld [vmem:[%s11 + $0x50] sm:$0xf]
    %v3402 = vld [vmem:[%s11 + $0x54] sm:$0xf]
    %v3403 = vld [vmem:[%s11 + $0x58] sm:$0xf]
    %v3404 = vld [vmem:[%s11 + $0x5c] sm:$0xf]
    %v3405 = vld [vmem:[%s11 + $0x60] sm:$0xf]
    %v3406 = vld [vmem:[%s11 + $0x64] sm:$0xf]
    %v3407 = vld [vmem:[%s11 + $0x68] sm:$0xf]
    %v3408 = vld [vmem:[%s11 + $0x6c] sm:$0xf]
    %v3409 = vld [vmem:[%s11 + $0x70] sm:$0xf]
    %v3410 = vld [vmem:[%s11 + $0x74] sm:$0xf]
    %v3411 = vld [vmem:[%s11 + $0x78] sm:$0xf]
    %v3412 = vld [vmem:[%s11 + $0x7c] sm:$0x1]
    %v3413 = vld [vmem:[%s12] sm:$0x1]
    %v3415 = vperm.slane %v3413, 0
    %v3449 = vunpack.c.l.b16 %v3381
    %v3450 = vunpack.c.l.b16 %v3382
    %v3451 = vunpack.c.l.b16 %v3383
    %v3452 = vunpack.c.l.b16 %v3384
    %v3453 = vunpack.c.l.b16 %v3385
    %v3454 = vunpack.c.l.b16 %v3386
    %v3455 = vunpack.c.l.b16 %v3387
    %v3456 = vunpack.c.l.b16 %v3388
    %v3457 = vunpack.c.l.b16 %v3389
    %v3458 = vunpack.c.l.b16 %v3390
    %v3459 = vunpack.c.l.b16 %v3391
    %v3460 = vunpack.c.l.b16 %v3392
    %v3461 = vunpack.c.l.b16 %v3393
    %v3462 = vunpack.c.l.b16 %v3394
    %v3463 = vunpack.c.l.b16 %v3395
    %v3464 = vunpack.c.l.b16 %v3396
    %v3465 = vunpack.c.l.b16 %v3397
    %v3466 = vunpack.c.l.b16 %v3398
    %v3467 = vunpack.c.l.b16 %v3399
    %v3468 = vunpack.c.l.b16 %v3400
    %v3469 = vunpack.c.l.b16 %v3401
    %v3470 = vunpack.c.l.b16 %v3402
    %v3471 = vunpack.c.l.b16 %v3403
    %v3472 = vunpack.c.l.b16 %v3404
    %v3473 = vunpack.c.l.b16 %v3405
    %v3474 = vunpack.c.l.b16 %v3406
    %v3475 = vunpack.c.l.b16 %v3407
    %v3476 = vunpack.c.l.b16 %v3408
    %v3477 = vunpack.c.l.b16 %v3409
    %v3478 = vunpack.c.l.b16 %v3410
    %v3479 = vunpack.c.l.b16 %v3411
    %v3480 = vunpack.c.l.b16 %v3412
    %v3481 = vpack.c.b16 %v3450, %v3449
    %v3482 = vpack.c.b16 %v3452, %v3451
    %v3483 = vpack.c.b16 %v3454, %v3453
    %v3484 = vpack.c.b16 %v3456, %v3455
    %v3485 = vpack.c.b16 %v3458, %v3457
    %v3486 = vpack.c.b16 %v3460, %v3459
    %v3487 = vpack.c.b16 %v3462, %v3461
    %v3488 = vpack.c.b16 %v3464, %v3463
    %v3489 = vpack.c.b16 %v3466, %v3465
    %v3490 = vpack.c.b16 %v3468, %v3467
    %v3491 = vpack.c.b16 %v3470, %v3469
    %v3492 = vpack.c.b16 %v3472, %v3471
    %v3493 = vpack.c.b16 %v3474, %v3473
    %v3494 = vpack.c.b16 %v3476, %v3475
    %v3495 = vpack.c.b16 %v3478, %v3477
    %v3496 = vpack.c.b16 %v3480, %v3479
    %v3513 = vsel %vm3053, %v3380, 0
    %v3516 = vsel %vm3057, %v3496, 0
    %3518 = vmatpush.bf16.msra.mxu0 %v3488
    %3519 = vmatpush.bf16.msra.mxu0 %v3487
    %3520 = vmatpush.bf16.msra.mxu0 %v3486
    %3521 = vmatpush.bf16.msra.mxu0 %v3485
    %3522 = vmatpush.bf16.msra.mxu0 %v3484
    %3523 = vmatpush.bf16.msra.mxu0 %v3483
    %3524 = vmatpush.bf16.msra.mxu0 %v3482
    %3525 = vmatpush.bf16.msra.mxu0 %v3481
    %3526 = vmatmul.bf16.gmra.mxu0 %v3379
    %v3527 = vpop.f32.mrf.mxu0
    %v3528 = vadd.f32 %v3415, %v3527
    %v3529 = vpop.f32.mrf.mxu0
    %3530 = vdwg.mxu0
    %3531 = vmatpush.bf16.msra.mxu0 %v3516
    %3532 = vmatpush.bf16.msra.mxu0 %v3495
    %3533 = vmatpush.bf16.msra.mxu0 %v3494
    %3534 = vmatpush.bf16.msra.mxu0 %v3493
    %3535 = vmatpush.bf16.msra.mxu0 %v3492
    %3536 = vmatpush.bf16.msra.mxu0 %v3491
    %3537 = vmatpush.bf16.msra.mxu0 %v3490
    %3538 = vmatpush.bf16.msra.mxu0 %v3489
    %3539 = vmatmul.bf16.gmra.mxu0 %v3513
    %v3540 = vpop.f32.mrf.mxu0
    %v3541 = vadd.f32 %v3528, %v3540
    %v3542 = vpop.f32.mrf.mxu0
    %3543 = vdwg.mxu0
    %vm3544 = vcmask 60416
    %3545 = vst.msk [vmem:[#allocation16] sm:$0xf] %vm3544, %v3541
    // Predicated region
    $region86: #{model_nn_forward.1} parent=1 // pred_check
      _
    $region87: #{model_nn_forward.1} parent=1 // pred_check_branch
      %3547 = sbr.rel (0) target = $region89
    $region88: #{model_nn_forward.1} parent=1 // pred_region
      %3549 = vsyncadd [#allocation4], 0
      %s3551 = sshll.u32 [#allocation16], 4
      %s3552 = int_to_ptr.vmem [resolvable:$true] %s3551
      %s3553 = sshll.u32 %s13, 4
      %s3554 = int_to_ptr.hbm [resolvable:$true] %s3553
      %3556 = dma.vmem_to_hbm [thread:$0]  %s3552, 64, %s3554, [#allocation4]
    $region89: #{model_nn_forward.1} parent=1 // pred_fallthru
      _
    // Predicated region
    $region90: #{model_nn_forward.1} parent=1 // pred_check
      _
    $region91: #{model_nn_forward.1} parent=1 // pred_check_branch
      %3558 = sbr.rel (0) target = $region93
    $region92: #{model_nn_forward.1} parent=1 // pred_region
      %3560 = dma.done [#allocation4], 64
    $region93: #{model_nn_forward.1} parent=1 // pred_fallthru
      _
    %3561 = vsyncpa [#allocation3], 1
    %3562 = vsyncpa [#allocation6], 1
    %3563 = vsyncpa [#allocation9], 1
    %3564 = vsyncpa [#allocation12], 1
    %3565 = vsyncpa [#allocation15], 1
    %3566 = vsyncpa [#allocation4], 1

</llo_original>
